<compile_context>
chip_gen: v7x
topology: tpu7x:2x2x1
jax: 0.10.0
libtpu: 0.0.40
codegen_flags: <defaults>
</compile_context>

<pallas_src>
import functools

import numpy as np
import jax
import jax.numpy as jnp
from jax import lax
from jax.experimental import pallas as pl
from jax.experimental.pallas import tpu as pltpu


def _lmf_fused_kernel(x_ref, buf0_ref, filtT_ref, wT_ref, roll_ref, sel_ref,
                      y_ref, buf_ref, *, precision):
    """One grid step = one LinearMemoryFilter timestep.

    x_ref     : VMEM f32 (1, 1, n_in)   input x_t (row, lane-dense)
    buf0_ref  : VMEM f32 (B, n_in)      initial buffer (transposed), constant block
    filtT_ref : VMEM f32 (n_in, n_in)   filter^T, constant block
    wT_ref    : VMEM f32 (n_in, n_out)  weights^T, constant block
    roll_ref  : VMEM f32 (B, B)         roll(-1) column permutation (transposed form)
    sel_ref   : VMEM f32 (B, n_in)      last-dup-wins scatter selection matrix
    y_ref     : VMEM f32 (1, 1, n_out)  output row y_t = weights @ buffer[:, 0]
    buf_ref   : VMEM f32 (B, n_in)      carried buffer state (transposed); constant
                                        block index -> resident in VMEM, written back
                                        to HBM once after the last step.
    """
    t = pl.program_id(0)

    # Initialize the carried state from the provided buffer on the first step.
    @pl.when(t == 0)
    def _():
        buf_ref[...] = buf0_ref[...]

    S = buf_ref[...]                                        # (B, n_in) = buffer^T

    # buffer <- filter @ roll(buffer, -1, 1)
    # transposed: S' = R @ (S @ filter^T)   (no physical roll / concatenate)
    SF = jnp.dot(S, filtT_ref[...],
                 preferred_element_type=jnp.float32, precision=precision)
    Sp = jnp.dot(roll_ref[...], SF,
                 preferred_element_type=jnp.float32, precision=precision)

    # buffer[:, delays] = x   (vectorized, last duplicate wins)
    # sel[c, j] = 1 iff j is the LAST input index with delays[j] == c.
    x_row = x_ref[0]                                        # (1, n_in)
    sel = sel_ref[...]                                      # (B, n_in)
    v = jnp.sum(sel * x_row, axis=1, keepdims=True)         # (B, 1): x[j_last[c]] (or 0)
    hit = jnp.sum(sel, axis=1, keepdims=True) > 0.5         # (B, 1): column targeted?
    S_new = jnp.where(hit, v, Sp)                           # (B, n_in)
    buf_ref[...] = S_new

    # y_t = weights @ buffer[:, 0]  ->  (1, n_in) @ (n_in, n_out), lane-dense row.
    y_ref[0] = jnp.dot(S_new[0:1, :], wT_ref[...],
                       preferred_element_type=jnp.float32, precision=precision)


def linear_memory_filter_forward(weights, filt, buffer, delays, xs,
                                 *, precision=lax.Precision.HIGHEST):
    """Run T forward steps of LinearMemoryFilter in a single fused pallas_call.

    weights : (n_out, n_in)   filt : (n_in, n_in)   buffer : (n_in, B)
    delays  : (n_in,) int     xs   : (T, n_in)
    Returns (ys (T, n_out), new_buffer (n_in, B)).
    """
    weights = jnp.asarray(weights, jnp.float32)
    filt = jnp.asarray(filt, jnp.float32)
    buffer = jnp.asarray(buffer, jnp.float32)
    xs = jnp.asarray(xs, jnp.float32)
    delays = jnp.asarray(delays, jnp.int32)

    n_out, n_in = weights.shape
    n_in_b, B = buffer.shape
    T = xs.shape[0]
    assert n_in_b == n_in and filt.shape == (n_in, n_in) and xs.shape[1] == n_in
    # Note: the module guarantees 0 <= delays < B (B = delays.max() + 1); a delay
    # outside that range would silently be dropped by the selection matrix below.

    # --- index preprocessing from the fixed integer parameter `delays` ---
    cols = jnp.arange(B, dtype=jnp.int32)
    # roll(-1, axis=1) as a left permutation on the transposed buffer:
    # R[c, k] = 1 iff k == (c + 1) % B, so roll(buf, -1, 1)^T == R @ buf^T
    R = (cols[None, :] == ((cols[:, None] + 1) % B)).astype(jnp.float32)   # (B, B)
    # Last-duplicate-wins selection: selmat[c, j] = 1 iff j is the last index
    # with delays[j] == c (empty column -> all-zero row -> untouched).
    j_idx = jnp.arange(n_in, dtype=jnp.int32)
    match = delays[None, :] == cols[:, None]                               # (B, n_in)
    j_last = jnp.max(jnp.where(match, j_idx[None, :], -1), axis=1)         # (B,)
    selmat = (j_idx[None, :] == j_last[:, None]).astype(jnp.float32)       # (B, n_in)

    xs3 = xs.reshape(T, 1, n_in)        # (T, 1, n_in): one lane-dense row per step
    bufT = buffer.T                     # (B, n_in): n_in on the lane axis
    filtT = filt.T                      # (n_in, n_in)
    wT = weights.T                      # (n_in, n_out)

    kernel = functools.partial(_lmf_fused_kernel, precision=precision)

    ys3, new_bufT = pl.pallas_call(
        kernel,
        out_shape=(jax.ShapeDtypeStruct((T, 1, n_out), jnp.float32),
                   jax.ShapeDtypeStruct((B, n_in), jnp.float32)),
        grid=(T,),
        in_specs=[
            pl.BlockSpec((1, 1, n_in), lambda t: (t, 0, 0)),   # x_t (streamed)
            pl.BlockSpec((B, n_in), lambda t: (0, 0)),         # initial buffer^T
            pl.BlockSpec((n_in, n_in), lambda t: (0, 0)),      # filter^T (resident)
            pl.BlockSpec((n_in, n_out), lambda t: (0, 0)),     # weights^T (resident)
            pl.BlockSpec((B, B), lambda t: (0, 0)),            # roll permutation
            pl.BlockSpec((B, n_in), lambda t: (0, 0)),         # scatter selection
        ],
        out_specs=(pl.BlockSpec((1, 1, n_out), lambda t: (t, 0, 0)),
                   pl.BlockSpec((B, n_in), lambda t: (0, 0))),
        compiler_params=pltpu.CompilerParams(
            dimension_semantics=("arbitrary",)),   # time axis carries the buffer
    )(xs3, bufT, filtT, wT, R, selmat)

    return ys3.reshape(T, n_out), new_bufT.T


def linear_memory_filter_step(weights, filt, buffer, delays, x,
                              *, precision=lax.Precision.HIGHEST):
    """Single-step convenience wrapper matching the module's forward()."""
    ys, new_buf = linear_memory_filter_forward(weights, filt, buffer, delays,
                                               jnp.asarray(x)[None, :],
                                               precision=precision)
    return ys[0], new_buf


def _reference_np(weights, filt, buffer, delays_np, xs):
    """float64 numpy reference with exact torch indexing semantics (T steps)."""
    W = np.asarray(weights, np.float64)
    F = np.asarray(filt, np.float64)
    b = np.asarray(buffer, np.float64)
    X = np.asarray(xs, np.float64)
    ys = []
    for t in range(X.shape[0]):
        b = F @ np.roll(b, -1, axis=1)
        for j in range(delays_np.shape[0]):     # sequential: last duplicate wins
            b[:, int(delays_np[j])] = X[t, j]
        ys.append(W @ b[:, 0])
    return np.stack(ys), b


if __name__ == "__main__":
    key = jax.random.PRNGKey(0)
    k1, k2, k3, k4, k5 = jax.random.split(key, 5)

    n_in, n_out, T = 32, 16, 8

    # delays per input (torch.long); force max delay = 7 so buffer width B = 8.
    delays_np = np.asarray(jax.random.randint(k1, (n_in,), 0, 8), dtype=np.int64)
    delays_np[-1] = 7
    B = int(delays_np.max()) + 1

    weights = jax.random.normal(k2, (n_out, n_in), dtype=jnp.float32)
    # modestly scaled filter so the recurrence stays well-conditioned over T steps
    filt = jax.random.normal(k3, (n_in, n_in), dtype=jnp.float32) / jnp.sqrt(n_in)
    xs = jax.random.normal(k4, (T, n_in), dtype=jnp.float32)
    # non-zero initial buffer so the roll + filter path is exercised
    buffer = jax.random.normal(k5, (n_in, B), dtype=jnp.float32)
    delays = jnp.asarray(delays_np, dtype=jnp.int32)

    ys, new_buf = linear_memory_filter_forward(weights, filt, buffer, delays, xs)
    jax.block_until_ready((ys, new_buf))

    ys_ref, buf_ref_np = _reference_np(weights, filt, buffer, delays_np, xs)
    assert np.allclose(np.asarray(ys), ys_ref, atol=1e-3, rtol=1e-3)
    assert np.allclose(np.asarray(new_buf), buf_ref_np, atol=1e-3, rtol=1e-3)

    print("KERNEL_OK")
</pallas_src>

<mosaic_0001>
module attributes {stable_mosaic.version = 11 : i64} {
  func.func @_lmf_fused_kernel(%arg0: i32, %arg1: memref<1x1x32xf32, #tpu.memory_space<vmem>>, %arg2: memref<8x32xf32, #tpu.memory_space<vmem>>, %arg3: memref<32x32xf32, #tpu.memory_space<vmem>>, %arg4: memref<32x16xf32, #tpu.memory_space<vmem>>, %arg5: memref<8x8xf32, #tpu.memory_space<vmem>>, %arg6: memref<8x32xf32, #tpu.memory_space<vmem>>, %arg7: memref<1x1x16xf32, #tpu.memory_space<vmem>>, %arg8: memref<8x32xf32, #tpu.memory_space<vmem>>) attributes {dimension_semantics = [#tpu.dimension_semantics<arbitrary>], iteration_bounds = array<i64: 8>, scalar_prefetch = 0 : i64, scratch_operands = 0 : i64, tpu.core_type = #tpu.core_type<tc>, window_params = [{transform_indices = @transform_0, window_bounds = array<i64: 1, 1, 32>}, {pipeline_mode = #tpu.pipeline_mode<synchronous>, transform_indices = @transform_1, window_bounds = array<i64: 8, 32>}, {pipeline_mode = #tpu.pipeline_mode<synchronous>, transform_indices = @transform_2, window_bounds = array<i64: 32, 32>}, {pipeline_mode = #tpu.pipeline_mode<synchronous>, transform_indices = @transform_3, window_bounds = array<i64: 32, 16>}, {pipeline_mode = #tpu.pipeline_mode<synchronous>, transform_indices = @transform_4, window_bounds = array<i64: 8, 8>}, {pipeline_mode = #tpu.pipeline_mode<synchronous>, transform_indices = @transform_5, window_bounds = array<i64: 8, 32>}, {transform_indices = @transform_6, window_bounds = array<i64: 1, 1, 16>}, {pipeline_mode = #tpu.pipeline_mode<synchronous>, transform_indices = @transform_7, window_bounds = array<i64: 8, 32>}]} {
    %c0_i32 = arith.constant 0 : i32
    %0 = arith.cmpi eq, %arg0, %c0_i32 : i32
    %1 = arith.extui %0 : i1 to i32
    %c0_i32_0 = arith.constant 0 : i32
    %2 = arith.cmpi ne, %1, %c0_i32_0 : i32
    scf.if %2 {
      %c0_23 = arith.constant 0 : index
      %c0_24 = arith.constant 0 : index
      %31 = vector.load %arg2[%c0_23, %c0_24] : memref<8x32xf32, #tpu.memory_space<vmem>>, vector<8x32xf32>
      %c0_25 = arith.constant 0 : index
      %c0_26 = arith.constant 0 : index
      %32 = vector.load %arg8[%c0_25, %c0_26] : memref<8x32xf32, #tpu.memory_space<vmem>>, vector<8x32xf32>
      tpu.vector_store %arg8[%c0_25, %c0_26], %31 {strides = array<i32>} : memref<8x32xf32, #tpu.memory_space<vmem>>, vector<8x32xf32>,
    } else {
    }
    %c0 = arith.constant 0 : index
    %c0_1 = arith.constant 0 : index
    %3 = vector.load %arg8[%c0, %c0_1] : memref<8x32xf32, #tpu.memory_space<vmem>>, vector<8x32xf32>
    %c0_2 = arith.constant 0 : index
    %c0_3 = arith.constant 0 : index
    %4 = vector.load %arg3[%c0_2, %c0_3] : memref<32x32xf32, #tpu.memory_space<vmem>>, vector<32x32xf32>
    %cst = arith.constant dense<0.000000e+00> : vector<8x32xf32>
    %5 = tpu.matmul %3, %4, %cst {dimension_numbers = #tpu.dot_dimension_numbers<[1], [0], [0], [1], [0, 0, 1, 1], [], []>, precision = #tpu.contract_precision<fp32>} : vector<8x32xf32>, vector<32x32xf32>, vector<8x32xf32> -> vector<8x32xf32>
    %c0_4 = arith.constant 0 : index
    %c0_5 = arith.constant 0 : index
    %6 = vector.load %arg5[%c0_4, %c0_5] : memref<8x8xf32, #tpu.memory_space<vmem>>, vector<8x8xf32>
    %cst_6 = arith.constant dense<0.000000e+00> : vector<8x32xf32>
    %7 = tpu.matmul %6, %5, %cst_6 {dimension_numbers = #tpu.dot_dimension_numbers<[1], [0], [0], [1], [0, 0, 1, 1], [], []>, precision = #tpu.contract_precision<fp32>} : vector<8x8xf32>, vector<8x32xf32>, vector<8x32xf32> -> vector<8x32xf32>
    %c0_7 = arith.constant 0 : index
    %c0_8 = arith.constant 0 : index
    %c0_9 = arith.constant 0 : index
    %8 = vector.load %arg1[%c0_7, %c0_8, %c0_9] : memref<1x1x32xf32, #tpu.memory_space<vmem>>, vector<1x1x32xf32>
    %9 = vector.shape_cast %8 : vector<1x1x32xf32> to vector<1x32xf32>
    %c0_10 = arith.constant 0 : index
    %c0_11 = arith.constant 0 : index
    %10 = vector.load %arg6[%c0_10, %c0_11] : memref<8x32xf32, #tpu.memory_space<vmem>>, vector<8x32xf32>
    %11 = vector.broadcast %9 : vector<1x32xf32> to vector<8x32xf32>
    %12 = arith.mulf %10, %11 : vector<8x32xf32>
    %cst_12 = arith.constant dense<0.000000e+00> : vector<8xf32>
    %13 = vector.multi_reduction <add>, %12, %cst_12 [1] : vector<8x32xf32> to vector<8xf32>
    %14 = vector.shape_cast %13 : vector<8xf32> to vector<8x1xf32>
    %cst_13 = arith.constant dense<0.000000e+00> : vector<8xf32>
    %15 = vector.multi_reduction <add>, %10, %cst_13 [1] : vector<8x32xf32> to vector<8xf32>
    %16 = vector.shape_cast %15 : vector<8xf32> to vector<8x1xf32>
    %cst_14 = arith.constant 5.000000e-01 : f32
    %17 = vector.broadcast %cst_14 : f32 to vector<8x1xf32>
    %18 = arith.cmpf ogt, %16, %17 : vector<8x1xf32>
    %19 = vector.shape_cast %18 : vector<8x1xi1> to vector<8x1xi1>
    %20 = vector.broadcast %19 : vector<8x1xi1> to vector<8x32xi1>
    %21 = vector.shape_cast %14 : vector<8x1xf32> to vector<8x1xf32>
    %22 = vector.broadcast %21 : vector<8x1xf32> to vector<8x32xf32>
    %23 = arith.select %20, %22, %7 : vector<8x32xi1>, vector<8x32xf32>
    %c0_15 = arith.constant 0 : index
    %c0_16 = arith.constant 0 : index
    %24 = vector.load %arg8[%c0_15, %c0_16] : memref<8x32xf32, #tpu.memory_space<vmem>>, vector<8x32xf32>
    tpu.vector_store %arg8[%c0_15, %c0_16], %23 {strides = array<i32>} : memref<8x32xf32, #tpu.memory_space<vmem>>, vector<8x32xf32>,
    %25 = vector.extract_strided_slice %23 {offsets = [0, 0], sizes = [1, 32], strides = [1, 1]} : vector<8x32xf32> to vector<1x32xf32>
    %c0_17 = arith.constant 0 : index
    %c0_18 = arith.constant 0 : index
    %26 = vector.load %arg4[%c0_17, %c0_18] : memref<32x16xf32, #tpu.memory_space<vmem>>, vector<32x16xf32>
    %cst_19 = arith.constant dense<0.000000e+00> : vector<1x16xf32>
    %27 = tpu.matmul %25, %26, %cst_19 {dimension_numbers = #tpu.dot_dimension_numbers<[1], [0], [0], [1], [0, 0, 1, 1], [], []>, precision = #tpu.contract_precision<fp32>} : vector<1x32xf32>, vector<32x16xf32>, vector<1x16xf32> -> vector<1x16xf32>
    %c0_20 = arith.constant 0 : index
    %c0_21 = arith.constant 0 : index
    %c0_22 = arith.constant 0 : index
    %28 = vector.load %arg7[%c0_20, %c0_21, %c0_22] : memref<1x1x16xf32, #tpu.memory_space<vmem>>, vector<1x1x16xf32>
    %29 = vector.shape_cast %28 : vector<1x1x16xf32> to vector<1x16xf32>
    %30 = vector.shape_cast %27 : vector<1x16xf32> to vector<1x1x16xf32>
    tpu.vector_store %arg7[%c0_20, %c0_21, %c0_22], %30 {strides = array<i32>} : memref<1x1x16xf32, #tpu.memory_space<vmem>>, vector<1x1x16xf32>,
    return
  }
  func.func @transform_0(%arg0: i32) -> (i32, i32, i32) {
    %c0_i32 = arith.constant 0 : i32
    %c0_i32_0 = arith.constant 0 : i32
    %c0_i32_1 = arith.constant 0 : i32
    return %arg0, %c0_i32, %c0_i32_0 : i32, i32, i32
  }
  func.func @transform_1(%arg0: i32) -> (i32, i32) {
    %c0_i32 = arith.constant 0 : i32
    %c0_i32_0 = arith.constant 0 : i32
    %c0_i32_1 = arith.constant 0 : i32
    return %c0_i32, %c0_i32_0 : i32, i32
  }
  func.func @transform_2(%arg0: i32) -> (i32, i32) {
    %c0_i32 = arith.constant 0 : i32
    %c0_i32_0 = arith.constant 0 : i32
    %c0_i32_1 = arith.constant 0 : i32
    return %c0_i32, %c0_i32_0 : i32, i32
  }
  func.func @transform_3(%arg0: i32) -> (i32, i32) {
    %c0_i32 = arith.constant 0 : i32
    %c0_i32_0 = arith.constant 0 : i32
    %c0_i32_1 = arith.constant 0 : i32
    return %c0_i32, %c0_i32_0 : i32, i32
  }
  func.func @transform_4(%arg0: i32) -> (i32, i32) {
    %c0_i32 = arith.constant 0 : i32
    %c0_i32_0 = arith.constant 0 : i32
    %c0_i32_1 = arith.constant 0 : i32
    return %c0_i32, %c0_i32_0 : i32, i32
  }
  func.func @transform_5(%arg0: i32) -> (i32, i32) {
    %c0_i32 = arith.constant 0 : i32
    %c0_i32_0 = arith.constant 0 : i32
    %c0_i32_1 = arith.constant 0 : i32
    return %c0_i32, %c0_i32_0 : i32, i32
  }
  func.func @transform_6(%arg0: i32) -> (i32, i32, i32) {
    %c0_i32 = arith.constant 0 : i32
    %c0_i32_0 = arith.constant 0 : i32
    %c0_i32_1 = arith.constant 0 : i32
    return %arg0, %c0_i32, %c0_i32_0 : i32, i32, i32
  }
  func.func @transform_7(%arg0: i32) -> (i32, i32) {
    %c0_i32 = arith.constant 0 : i32
    %c0_i32_0 = arith.constant 0 : i32
    %c0_i32_1 = arith.constant 0 : i32
    return %c0_i32, %c0_i32_0 : i32, i32
  }
}

</mosaic_0001>

<llo_original>
// kernel: tpu_custom_call.1
$region0: #{tpu_custom_call.1}
  #allocation0 [shape = 'u32[]', space=smem, size = 0x4, offset = 0x4, fixed_abs, tag = 'smem constant byte address 0x4 - core index']
  #allocation1 [shape = 'u32[144,128]{1,0:T(1,128)}', space=vmem, size = 0x12000, scoped, tag = 'internal scratch']
  %s0 = inlined_call_operand.vmem [shape: f32[8,1,32], index: 0, kind: input, shape index: {}]
  %s1 = inlined_call_operand.vmem [shape: f32[8,32], index: 1, kind: input, shape index: {}]
  %s2 = inlined_call_operand.vmem [shape: f32[32,32], index: 2, kind: input, shape index: {}]
  %s3 = inlined_call_operand.vmem [shape: f32[32,16], index: 3, kind: input, shape index: {}]
  %s4 = inlined_call_operand.vmem [shape: f32[8,8], index: 4, kind: input, shape index: {}]
  %s5 = inlined_call_operand.vmem [shape: f32[8,32], index: 5, kind: input, shape index: {}]
  %s6 = inlined_call_operand.hbm [shape: f32[8,1,16], index: 6, kind: output, shape index: {0}]
  %s7 = inlined_call_operand.hbm [shape: f32[8,32], index: 7, kind: output, shape index: {1}]
  %8 = xla_tuple %s6, %s7
  %s9 = sld [smem:[#allocation0]]
  $region69: #{tpu_custom_call.1} parent=0
    _
  %s11 = ssub.s32 1, %s9
  %s12 = scalar_select 0, %s11, %s9
  $region1: #{tpu_custom_call.1} parent=0
    #allocation2 [shape = 'u8[1024]{0}', space=vmem, size = 0x400, scoped, tag = 'output window, operand 0']
    #allocation3 [shape = 's32[2]{0}', space=sflag, size = 0x8, scoped, tag = 'scoped memory for tpu_custom_call.1']
    #allocation4 [shape = 'u8[4096]{0}', space=vmem, size = 0x1000, scoped, tag = 'output window, operand 1, single buffered']
    #allocation5 [shape = 's32[1]{0}', space=sflag, size = 0x4, scoped, tag = 'scoped memory for tpu_custom_call.1']
    %13 = vsyncpa [#allocation3], 0
    %s14 = scalar_lea.sflag [#allocation3], 1
    %15 = vsyncpa %s14, 0
    %16 = vsyncpa [#allocation5], 0
    loop: start=0, step=1, limit=10
    $region2: #{tpu_custom_call.1} parent=1 // loop_pre_header
      _
    $region3: #{tpu_custom_call.1} parent=1 // loop_header
      %s18 = sphi 0, %s22
      %p19 = scmp.ge.s32.totalorder %s18, 10
      %s28 = sphi 0, %s30
      %s31 = sphi 0, %s28
      %s32 = sphi 0, %s31
      %s48 = sphi 0, %s32
      %s52 = sphi 0, %s52
      %s54 = sphi 0, %s52
      %s55 = sphi 0, %s54
      %s69 = sphi 0, %s55
      %s73 = sphi 0, %s73
      %s75 = sphi 0, %s73
      %s76 = sphi 0, %s75
      %s90 = sphi 0, %s76
      %s94 = sphi 0, %s94
      %s96 = sphi 0, %s94
      %s97 = sphi 0, %s96
      %s111 = sphi 0, %s97
      %s115 = sphi 0, %s115
      %s117 = sphi 0, %s115
      %s118 = sphi 0, %s117
      %s132 = sphi 0, %s118
      %s136 = sphi 0, %s136
      %s138 = sphi 0, %s136
      %s139 = sphi 0, %s138
      %s153 = sphi 0, %s139
      %s159 = sphi 0, %s161
      %s162 = sphi 0, %s159
      %s163 = sphi 0, %s162
      %s179 = sphi 0, %s163
      %s183 = sphi 0, %s183
      %s185 = sphi 0, %s183
      %s186 = sphi 0, %s185
      %s200 = sphi 0, %s186
    $region4: #{tpu_custom_call.1} parent=1 // loop_header_branch
      %21 = sbr.rel (%p19) target = $region8
    $region5: #{tpu_custom_call.1} parent=1 // loop_body
      %s23 = ssub.s32 %s18, 1
      %s24 = ssub.s32 %s18, 2
      %s25 = sadd.s32 %s18, 1
      %s26 = ssub.s32 %s18, %s25
      %p27 = scmp.eq.s32.totalorder %s26, 0
      %s29 = sadd.s32 %s28, 1
      %s30 = scalar_select %p27, %s28, %s29
      %p33 = pneg %p27
      %p34 = scmp.eq.s32.totalorder %s18, 7
      %p35 = por %p33, %p34
      %p36 = scmp.ne.s32.totalorder %s28, %s31
      %p37 = scmp.eq.s32.totalorder %s18, 0
      %p38 = por %p36, %p37
      %p39 = scmp.ne.s32.totalorder %s28, %s31
      %p40 = scmp.eq.s32.totalorder %s23, 7
      %p41 = por %p39, %p40
      %p42 = scmp.ne.s32.totalorder %s31, %s32
      %p43 = scmp.eq.s32.totalorder %s23, 0
      %p44 = por %p42, %p43
      %p45 = scmp.ne.s32.totalorder %s31, %s32
      %p46 = scmp.eq.s32.totalorder %s24, 7
      %p47 = por %p45, %p46
      %p49 = scmp.ne.s32.totalorder %s32, %s48
      %p50 = scmp.eq.s32.totalorder %s24, 0
      %p51 = por %p49, %p50
      %s53 = sadd.s32 %s52, 1
      %p56 = scmp.eq.s32.totalorder %s18, 7
      %p57 = scmp.ne.s32.totalorder %s52, %s54
      %p58 = scmp.eq.s32.totalorder %s18, 0
      %p59 = por %p57, %p58
      %p60 = scmp.ne.s32.totalorder %s52, %s54
      %p61 = scmp.eq.s32.totalorder %s23, 7
      %p62 = por %p60, %p61
      %p63 = scmp.ne.s32.totalorder %s54, %s55
      %p64 = scmp.eq.s32.totalorder %s23, 0
      %p65 = por %p63, %p64
      %p66 = scmp.ne.s32.totalorder %s54, %s55
      %p67 = scmp.eq.s32.totalorder %s24, 7
      %p68 = por %p66, %p67
      %p70 = scmp.ne.s32.totalorder %s55, %s69
      %p71 = scmp.eq.s32.totalorder %s24, 0
      %p72 = por %p70, %p71
      %s74 = sadd.s32 %s73, 1
      %p77 = scmp.eq.s32.totalorder %s18, 7
      %p78 = scmp.ne.s32.totalorder %s73, %s75
      %p79 = scmp.eq.s32.totalorder %s18, 0
      %p80 = por %p78, %p79
      %p81 = scmp.ne.s32.totalorder %s73, %s75
      %p82 = scmp.eq.s32.totalorder %s23, 7
      %p83 = por %p81, %p82
      %p84 = scmp.ne.s32.totalorder %s75, %s76
      %p85 = scmp.eq.s32.totalorder %s23, 0
      %p86 = por %p84, %p85
      %p87 = scmp.ne.s32.totalorder %s75, %s76
      %p88 = scmp.eq.s32.totalorder %s24, 7
      %p89 = por %p87, %p88
      %p91 = scmp.ne.s32.totalorder %s76, %s90
      %p92 = scmp.eq.s32.totalorder %s24, 0
      %p93 = por %p91, %p92
      %s95 = sadd.s32 %s94, 1
      %p98 = scmp.eq.s32.totalorder %s18, 7
      %p99 = scmp.ne.s32.totalorder %s94, %s96
      %p100 = scmp.eq.s32.totalorder %s18, 0
      %p101 = por %p99, %p100
      %p102 = scmp.ne.s32.totalorder %s94, %s96
      %p103 = scmp.eq.s32.totalorder %s23, 7
      %p104 = por %p102, %p103
      %p105 = scmp.ne.s32.totalorder %s96, %s97
      %p106 = scmp.eq.s32.totalorder %s23, 0
      %p107 = por %p105, %p106
      %p108 = scmp.ne.s32.totalorder %s96, %s97
      %p109 = scmp.eq.s32.totalorder %s24, 7
      %p110 = por %p108, %p109
      %p112 = scmp.ne.s32.totalorder %s97, %s111
      %p113 = scmp.eq.s32.totalorder %s24, 0
      %p114 = por %p112, %p113
      %s116 = sadd.s32 %s115, 1
      %p119 = scmp.eq.s32.totalorder %s18, 7
      %p120 = scmp.ne.s32.totalorder %s115, %s117
      %p121 = scmp.eq.s32.totalorder %s18, 0
      %p122 = por %p120, %p121
      %p123 = scmp.ne.s32.totalorder %s115, %s117
      %p124 = scmp.eq.s32.totalorder %s23, 7
      %p125 = por %p123, %p124
      %p126 = scmp.ne.s32.totalorder %s117, %s118
      %p127 = scmp.eq.s32.totalorder %s23, 0
      %p128 = por %p126, %p127
      %p129 = scmp.ne.s32.totalorder %s117, %s118
      %p130 = scmp.eq.s32.totalorder %s24, 7
      %p131 = por %p129, %p130
      %p133 = scmp.ne.s32.totalorder %s118, %s132
      %p134 = scmp.eq.s32.totalorder %s24, 0
      %p135 = por %p133, %p134
      %s137 = sadd.s32 %s136, 1
      %p140 = scmp.eq.s32.totalorder %s18, 7
      %p141 = scmp.ne.s32.totalorder %s136, %s138
      %p142 = scmp.eq.s32.totalorder %s18, 0
      %p143 = por %p141, %p142
      %p144 = scmp.ne.s32.totalorder %s136, %s138
      %p145 = scmp.eq.s32.totalorder %s23, 7
      %p146 = por %p144, %p145
      %p147 = scmp.ne.s32.totalorder %s138, %s139
      %p148 = scmp.eq.s32.totalorder %s23, 0
      %p149 = por %p147, %p148
      %p150 = scmp.ne.s32.totalorder %s138, %s139
      %p151 = scmp.eq.s32.totalorder %s24, 7
      %p152 = por %p150, %p151
      %p154 = scmp.ne.s32.totalorder %s139, %s153
      %p155 = scmp.eq.s32.totalorder %s24, 0
      %p156 = por %p154, %p155
      %s157 = ssub.s32 %s18, %s25
      %p158 = scmp.eq.s32.totalorder %s157, 0
      %s160 = sadd.s32 %s159, 1
      %s161 = scalar_select %p158, %s159, %s160
      %p164 = pneg %p158
      %p165 = scmp.eq.s32.totalorder %s18, 7
      %p166 = por %p164, %p165
      %p167 = scmp.ne.s32.totalorder %s159, %s162
      %p168 = scmp.eq.s32.totalorder %s18, 0
      %p169 = por %p167, %p168
      %p170 = scmp.ne.s32.totalorder %s159, %s162
      %p171 = scmp.eq.s32.totalorder %s23, 7
      %p172 = por %p170, %p171
      %p173 = scmp.ne.s32.totalorder %s162, %s163
      %p174 = scmp.eq.s32.totalorder %s23, 0
      %p175 = por %p173, %p174
      %p176 = scmp.ne.s32.totalorder %s162, %s163
      %p177 = scmp.eq.s32.totalorder %s24, 7
      %p178 = por %p176, %p177
      %p180 = scmp.ne.s32.totalorder %s163, %s179
      %p181 = scmp.eq.s32.totalorder %s24, 0
      %p182 = por %p180, %p181
      %s184 = sadd.s32 %s183, 1
      %p187 = scmp.eq.s32.totalorder %s18, 7
      %p188 = scmp.ne.s32.totalorder %s183, %s185
      %p189 = scmp.eq.s32.totalorder %s18, 0
      %p190 = por %p188, %p189
      %p191 = scmp.ne.s32.totalorder %s183, %s185
      %p192 = scmp.eq.s32.totalorder %s23, 7
      %p193 = por %p191, %p192
      %p194 = scmp.ne.s32.totalorder %s185, %s186
      %p195 = scmp.eq.s32.totalorder %s23, 0
      %p196 = por %p194, %p195
      %p197 = scmp.ne.s32.totalorder %s185, %s186
      %p198 = scmp.eq.s32.totalorder %s24, 7
      %p199 = por %p197, %p198
      %p201 = scmp.ne.s32.totalorder %s186, %s200
      %p202 = scmp.eq.s32.totalorder %s24, 0
      %p203 = por %p201, %p202
      %p204 = scmp.le.s32.totalorder 1, %s18
      %p205 = scmp.lt.s32.totalorder %s18, 9
      %p206 = pnand %p204, %p205
      %p207 = pneg %p206
      // Predicated region
      $region9: #{tpu_custom_call.1} parent=5 // pred_check
        _
      $region10: #{tpu_custom_call.1} parent=5 // pred_check_branch
        %209 = sbr.rel (%p206) target = $region12
      $region11: #{tpu_custom_call.1} parent=5 // pred_region
        %s210 = ssub.s32 %s18, 1
        // Predicated region
        $region13: #{tpu_custom_call.1} parent=11 // pred_check
          %p211 = pneg %p65
        $region14: #{tpu_custom_call.1} parent=11 // pred_check_branch
          %213 = sbr.rel (%p211) target = $region16
        $region15: #{tpu_custom_call.1} parent=11 // pred_region
          _
        $region16: #{tpu_custom_call.1} parent=11 // pred_fallthru
          _
        // Predicated region
        $region17: #{tpu_custom_call.1} parent=11 // pred_check
          %p214 = pneg %p86
        $region18: #{tpu_custom_call.1} parent=11 // pred_check_branch
          %216 = sbr.rel (%p214) target = $region20
        $region19: #{tpu_custom_call.1} parent=11 // pred_region
          _
        $region20: #{tpu_custom_call.1} parent=11 // pred_fallthru
          _
        // Predicated region
        $region21: #{tpu_custom_call.1} parent=11 // pred_check
          %p217 = pneg %p107
        $region22: #{tpu_custom_call.1} parent=11 // pred_check_branch
          %219 = sbr.rel (%p217) target = $region24
        $region23: #{tpu_custom_call.1} parent=11 // pred_region
          _
        $region24: #{tpu_custom_call.1} parent=11 // pred_fallthru
          _
        // Predicated region
        $region25: #{tpu_custom_call.1} parent=11 // pred_check
          %p220 = pneg %p128
        $region26: #{tpu_custom_call.1} parent=11 // pred_check_branch
          %222 = sbr.rel (%p220) target = $region28
        $region27: #{tpu_custom_call.1} parent=11 // pred_region
          _
        $region28: #{tpu_custom_call.1} parent=11 // pred_fallthru
          _
        // Predicated region
        $region29: #{tpu_custom_call.1} parent=11 // pred_check
          %p223 = pneg %p149
        $region30: #{tpu_custom_call.1} parent=11 // pred_check_branch
          %225 = sbr.rel (%p223) target = $region32
        $region31: #{tpu_custom_call.1} parent=11 // pred_region
          _
        $region32: #{tpu_custom_call.1} parent=11 // pred_fallthru
          _
      $region12: #{tpu_custom_call.1} parent=5 // pred_fallthru
        _
      %p226 = scmp.lt.s32.totalorder %s18, 8
      // Predicated region
      $region33: #{tpu_custom_call.1} parent=5 // pred_check
        %p227 = pneg %p226
      $region34: #{tpu_custom_call.1} parent=5 // pred_check_branch
        %229 = sbr.rel (%p227) target = $region36
      $region35: #{tpu_custom_call.1} parent=5 // pred_region
        // Predicated region
        $region37: #{tpu_custom_call.1} parent=35 // pred_check
          %p230 = pneg %p38
        $region38: #{tpu_custom_call.1} parent=35 // pred_check_branch
          %232 = sbr.rel (%p230) target = $region40
        $region39: #{tpu_custom_call.1} parent=35 // pred_region
          %p233 = scmp.lt.s32.totalorder %s18, 7
          %s234 = scalar_select %p233, %s18, 7
          %s235 = scalar_lea.vmem %s0, %s234
        $region40: #{tpu_custom_call.1} parent=35 // pred_fallthru
          _
      $region36: #{tpu_custom_call.1} parent=5 // pred_fallthru
        _
      %p236 = scmp.le.s32.totalorder 1, %s18
      %p237 = scmp.lt.s32.totalorder %s18, 9
      %p238 = pnand %p236, %p237
      %p239 = pneg %p238
      // Predicated region
      $region41: #{tpu_custom_call.1} parent=5 // pred_check
        _
      $region42: #{tpu_custom_call.1} parent=5 // pred_check_branch
        %241 = sbr.rel (%p238) target = $region44
      $region43: #{tpu_custom_call.1} parent=5 // pred_region
        %s242 = ssub.s32 %s18, 1
        %p243 = scmp.lt.s32.totalorder %s23, 7
        %s244 = scalar_select %p243, %s23, 7
        %s245 = scalar_lea.vmem %s0, %s244
        %p246 = pneg %p44
        %p247 = pneg %p41
        %p248 = pneg %p65
        %p249 = pneg %p62
        %p250 = pneg %p86
        %p251 = pneg %p83
        %p252 = pneg %p107
        %p253 = pneg %p104
        %p254 = pneg %p128
        %p255 = pneg %p125
        %p256 = pneg %p149
        %p257 = pneg %p146
        %p258 = pneg %p175
        %p259 = pneg %p172
        %s260 = sand.u32 %s162, 1
        %s261 = scalar_lea.sflag [#allocation3], %s260
        %s262 = sand.u32 %s162, 1
        %s263 = scalar_lea.vmem [#allocation2], %s262
        %p264 = pneg %p196
        %p265 = pneg %p193
        %p266 = scmp.lt.s32.totalorder %s23, 7
        %s267 = scalar_select %p266, %s23, 7
        %s268 = scalar_lea.vmem %s0, %s267
        %p269 = scmp.eq.s32.totalorder %s23, 0
        // Predicated region
        $region45: #{tpu_custom_call.1} parent=43 // pred_check
          %p270 = pneg %p269
        $region46: #{tpu_custom_call.1} parent=43 // pred_check_branch
          %272 = sbr.rel (%p270) target = $region48
        $region47: #{tpu_custom_call.1} parent=43 // pred_region
          %v273 = vld [vmem:[%s1] sm:$0xff]
          %vm274 = vcmask 261120
          %275 = vst.msk [vmem:[#allocation4] sm:$0xff] %vm274, %v273
        $region48: #{tpu_custom_call.1} parent=43 // pred_fallthru
          _
        %v276 = vld [vmem:[#allocation4] sm:$0xff]
        %v277 = vld [vmem:[%s2] sm:$0xff]
        %v278 = vld [vmem:[%s2 + $0x8] sm:$0xff]
        %v279 = vld [vmem:[%s2 + $0x10] sm:$0xff]
        %v280 = vld [vmem:[%s2 + $0x18] sm:$0xff]
        %vm281 = vcmask 261120
        %v283 = vsel %vm281, %v276, 0
        %285 = vmatprep.subr.mxu0 0.0
        %v286 = vand.u32 %v277, 4294901760
        %287 = vmatpush1.msra.mxu0 %v286
        %288 = vmatprep.subr.mxu0 0.0
        %v289 = vand.u32 %v278, 4294901760
        %290 = vmatpush1.msra.mxu0 %v289
        %291 = vmatprep.subr.mxu0 0.0
        %v292 = vand.u32 %v279, 4294901760
        %293 = vmatpush1.msra.mxu0 %v292
        %294 = vmatprep.subr.mxu0 0.0
        %v295 = vand.u32 %v280, 4294901760
        %296 = vmatpush1.msra.mxu0 %v295
        %297 = vmatprep.subr.mxu0 0.0
        %298 = vmatpush1.msra.mxu0 0.0
        %299 = vmatprep.subr.mxu0 0.0
        %300 = vmatpush1.msra.mxu0 0.0
        %301 = vmatprep.subr.mxu0 0.0
        %302 = vmatpush1.msra.mxu0 0.0
        %303 = vmatprep.subr.mxu0 0.0
        %304 = vmatpush1.msra.mxu0 0.0
        %305 = vmatprep.subr.mxu0 0.0
        %306 = vmatpush1.msra.mxu0 0.0
        %307 = vmatprep.subr.mxu0 0.0
        %308 = vmatpush1.msra.mxu0 0.0
        %309 = vmatprep.subr.mxu0 0.0
        %310 = vmatpush1.msra.mxu0 0.0
        %311 = vmatprep.subr.mxu0 0.0
        %312 = vmatpush1.msra.mxu0 0.0
        %313 = vmatprep.subr.mxu0 0.0
        %314 = vmatpush1.msra.mxu0 0.0
        %315 = vmatprep.subr.mxu0 0.0
        %316 = vmatpush1.msra.mxu0 0.0
        %317 = vmatprep.subr.mxu0 0.0
        %318 = vmatpush1.msra.mxu0 0.0
        %319 = vmatprep.subr.mxu0 0.0
        %320 = vmatpush1.msra.mxu0 0.0
        %321 = vmatprep.subr.mxu0 0.0
        %322 = vmatpush1.msra.mxu0 0.0
        %323 = vmatprep.subr.mxu0 0.0
        %324 = vmatpush1.msra.mxu0 0.0
        %325 = vmatprep.subr.mxu0 0.0
        %326 = vmatpush1.msra.mxu0 0.0
        %327 = vmatprep.subr.mxu0 0.0
        %328 = vmatpush1.msra.mxu0 0.0
        %329 = vmatprep.subr.mxu0 0.0
        %330 = vmatpush1.msra.mxu0 0.0
        %331 = vmatprep.subr.mxu0 0.0
        %332 = vmatpush1.msra.mxu0 0.0
        %333 = vmatprep.subr.mxu0 0.0
        %334 = vmatpush1.msra.mxu0 0.0
        %335 = vmatprep.subr.mxu0 0.0
        %336 = vmatpush1.msra.mxu0 0.0
        %337 = vmatprep.subr.mxu0 0.0
        %338 = vmatpush1.msra.mxu0 0.0
        %339 = vmatprep.subr.mxu0 0.0
        %340 = vmatpush1.msra.mxu0 0.0
        %341 = vmatprep.subr.mxu0 0.0
        %342 = vmatpush1.msra.mxu0 0.0
        %343 = vmatprep.subr.mxu0 0.0
        %344 = vmatpush1.msra.mxu0 0.0
        %345 = vmatprep.subr.mxu0 0.0
        %346 = vmatpush1.msra.mxu0 0.0
        %347 = vmatprep.subr.mxu0 0.0
        %348 = vmatpush1.msra.mxu0 0.0
        %349 = vmatprep.subr.mxu0 0.0
        %350 = vmatpush1.msra.mxu0 0.0
        %351 = vmatprep.subr.mxu0 0.0
        %352 = vmatpush1.msra.mxu0 0.0
        %353 = vmatprep.mubr.f32.mxu0 0.0
        %v354 = vand.u32 %v283, 4294901760
        %v355 = vsub.f32 %v283, %v354
        %v356 = vand.u32 %v355, 4294901760
        %v357 = vsub.f32 %v355, %v356
        %v358 = vand.u32 %v357, 4294901760
        %359 = vmatmul.mubr.f32.gmra.mrb[0].mxu0 %v358
        %v360 = vpop.f32.mrb[0].mxu0
        %v361 = vadd.f32 0.0, %v360
        %v362 = vpop.f32.mrb[0].mxu0
        %363 = vdwg.mxu0
        %364 = vmatprep.subr.mxu0 0.0
        %v365 = vand.u32 %v277, 4294901760
        %v366 = vsub.f32 %v277, %v365
        %v367 = vand.u32 %v366, 4294901760
        %v368 = vsub.f32 %v366, %v367
        %v369 = vand.u32 %v368, 4294901760
        %370 = vmatpush1.msra.mxu0 %v369
        %371 = vmatprep.subr.mxu0 0.0
        %v372 = vand.u32 %v278, 4294901760
        %v373 = vsub.f32 %v278, %v372
        %v374 = vand.u32 %v373, 4294901760
        %v375 = vsub.f32 %v373, %v374
        %v376 = vand.u32 %v375, 4294901760
        %377 = vmatpush1.msra.mxu0 %v376
        %378 = vmatprep.subr.mxu0 0.0
        %v379 = vand.u32 %v279, 4294901760
        %v380 = vsub.f32 %v279, %v379
        %v381 = vand.u32 %v380, 4294901760
        %v382 = vsub.f32 %v380, %v381
        %v383 = vand.u32 %v382, 4294901760
        %384 = vmatpush1.msra.mxu0 %v383
        %385 = vmatprep.subr.mxu0 0.0
        %v386 = vand.u32 %v280, 4294901760
        %v387 = vsub.f32 %v280, %v386
        %v388 = vand.u32 %v387, 4294901760
        %v389 = vsub.f32 %v387, %v388
        %v390 = vand.u32 %v389, 4294901760
        %391 = vmatpush1.msra.mxu0 %v390
        %392 = vmatprep.subr.mxu0 0.0
        %393 = vmatpush1.msra.mxu0 0.0
        %394 = vmatprep.subr.mxu0 0.0
        %395 = vmatpush1.msra.mxu0 0.0
        %396 = vmatprep.subr.mxu0 0.0
        %397 = vmatpush1.msra.mxu0 0.0
        %398 = vmatprep.subr.mxu0 0.0
        %399 = vmatpush1.msra.mxu0 0.0
        %400 = vmatprep.subr.mxu0 0.0
        %401 = vmatpush1.msra.mxu0 0.0
        %402 = vmatprep.subr.mxu0 0.0
        %403 = vmatpush1.msra.mxu0 0.0
        %404 = vmatprep.subr.mxu0 0.0
        %405 = vmatpush1.msra.mxu0 0.0
        %406 = vmatprep.subr.mxu0 0.0
        %407 = vmatpush1.msra.mxu0 0.0
        %408 = vmatprep.subr.mxu0 0.0
        %409 = vmatpush1.msra.mxu0 0.0
        %410 = vmatprep.subr.mxu0 0.0
        %411 = vmatpush1.msra.mxu0 0.0
        %412 = vmatprep.subr.mxu0 0.0
        %413 = vmatpush1.msra.mxu0 0.0
        %414 = vmatprep.subr.mxu0 0.0
        %415 = vmatpush1.msra.mxu0 0.0
        %416 = vmatprep.subr.mxu0 0.0
        %417 = vmatpush1.msra.mxu0 0.0
        %418 = vmatprep.subr.mxu0 0.0
        %419 = vmatpush1.msra.mxu0 0.0
        %420 = vmatprep.subr.mxu0 0.0
        %421 = vmatpush1.msra.mxu0 0.0
        %422 = vmatprep.subr.mxu0 0.0
        %423 = vmatpush1.msra.mxu0 0.0
        %424 = vmatprep.subr.mxu0 0.0
        %425 = vmatpush1.msra.mxu0 0.0
        %426 = vmatprep.subr.mxu0 0.0
        %427 = vmatpush1.msra.mxu0 0.0
        %428 = vmatprep.subr.mxu0 0.0
        %429 = vmatpush1.msra.mxu0 0.0
        %430 = vmatprep.subr.mxu0 0.0
        %431 = vmatpush1.msra.mxu0 0.0
        %432 = vmatprep.subr.mxu0 0.0
        %433 = vmatpush1.msra.mxu0 0.0
        %434 = vmatprep.subr.mxu0 0.0
        %435 = vmatpush1.msra.mxu0 0.0
        %436 = vmatprep.subr.mxu0 0.0
        %437 = vmatpush1.msra.mxu0 0.0
        %438 = vmatprep.subr.mxu0 0.0
        %439 = vmatpush1.msra.mxu0 0.0
        %440 = vmatprep.subr.mxu0 0.0
        %441 = vmatpush1.msra.mxu0 0.0
        %442 = vmatprep.subr.mxu0 0.0
        %443 = vmatpush1.msra.mxu0 0.0
        %444 = vmatprep.subr.mxu0 0.0
        %445 = vmatpush1.msra.mxu0 0.0
        %446 = vmatprep.subr.mxu0 0.0
        %447 = vmatpush1.msra.mxu0 0.0
        %448 = vmatprep.mubr.f32.mxu0 0.0
        %v449 = vand.u32 %v283, 4294901760
        %450 = vmatmul.mubr.f32.gmra.mrb[0].mxu0 %v449
        %v451 = vpop.f32.mrb[0].mxu0
        %v452 = vadd.f32 %v361, %v451
        %v453 = vpop.f32.mrb[0].mxu0
        %454 = vdwg.mxu0
        %455 = vmatprep.subr.mxu0 0.0
        %v456 = vand.u32 %v277, 4294901760
        %v457 = vsub.f32 %v277, %v456
        %458 = vmatpush1.msra.mxu0 %v457
        %459 = vmatprep.subr.mxu0 0.0
        %v460 = vand.u32 %v278, 4294901760
        %v461 = vsub.f32 %v278, %v460
        %462 = vmatpush1.msra.mxu0 %v461
        %463 = vmatprep.subr.mxu0 0.0
        %v464 = vand.u32 %v279, 4294901760
        %v465 = vsub.f32 %v279, %v464
        %466 = vmatpush1.msra.mxu0 %v465
        %467 = vmatprep.subr.mxu0 0.0
        %v468 = vand.u32 %v280, 4294901760
        %v469 = vsub.f32 %v280, %v468
        %470 = vmatpush1.msra.mxu0 %v469
        %471 = vmatprep.subr.mxu0 0.0
        %472 = vmatpush1.msra.mxu0 0.0
        %473 = vmatprep.subr.mxu0 0.0
        %474 = vmatpush1.msra.mxu0 0.0
        %475 = vmatprep.subr.mxu0 0.0
        %476 = vmatpush1.msra.mxu0 0.0
        %477 = vmatprep.subr.mxu0 0.0
        %478 = vmatpush1.msra.mxu0 0.0
        %479 = vmatprep.subr.mxu0 0.0
        %480 = vmatpush1.msra.mxu0 0.0
        %481 = vmatprep.subr.mxu0 0.0
        %482 = vmatpush1.msra.mxu0 0.0
        %483 = vmatprep.subr.mxu0 0.0
        %484 = vmatpush1.msra.mxu0 0.0
        %485 = vmatprep.subr.mxu0 0.0
        %486 = vmatpush1.msra.mxu0 0.0
        %487 = vmatprep.subr.mxu0 0.0
        %488 = vmatpush1.msra.mxu0 0.0
        %489 = vmatprep.subr.mxu0 0.0
        %490 = vmatpush1.msra.mxu0 0.0
        %491 = vmatprep.subr.mxu0 0.0
        %492 = vmatpush1.msra.mxu0 0.0
        %493 = vmatprep.subr.mxu0 0.0
        %494 = vmatpush1.msra.mxu0 0.0
        %495 = vmatprep.subr.mxu0 0.0
        %496 = vmatpush1.msra.mxu0 0.0
        %497 = vmatprep.subr.mxu0 0.0
        %498 = vmatpush1.msra.mxu0 0.0
        %499 = vmatprep.subr.mxu0 0.0
        %500 = vmatpush1.msra.mxu0 0.0
        %501 = vmatprep.subr.mxu0 0.0
        %502 = vmatpush1.msra.mxu0 0.0
        %503 = vmatprep.subr.mxu0 0.0
        %504 = vmatpush1.msra.mxu0 0.0
        %505 = vmatprep.subr.mxu0 0.0
        %506 = vmatpush1.msra.mxu0 0.0
        %507 = vmatprep.subr.mxu0 0.0
        %508 = vmatpush1.msra.mxu0 0.0
        %509 = vmatprep.subr.mxu0 0.0
        %510 = vmatpush1.msra.mxu0 0.0
        %511 = vmatprep.subr.mxu0 0.0
        %512 = vmatpush1.msra.mxu0 0.0
        %513 = vmatprep.subr.mxu0 0.0
        %514 = vmatpush1.msra.mxu0 0.0
        %515 = vmatprep.subr.mxu0 0.0
        %516 = vmatpush1.msra.mxu0 0.0
        %517 = vmatprep.subr.mxu0 0.0
        %518 = vmatpush1.msra.mxu0 0.0
        %519 = vmatprep.subr.mxu0 0.0
        %520 = vmatpush1.msra.mxu0 0.0
        %521 = vmatprep.subr.mxu0 0.0
        %522 = vmatpush1.msra.mxu0 0.0
        %523 = vmatprep.subr.mxu0 0.0
        %524 = vmatpush1.msra.mxu0 0.0
        %525 = vmatprep.subr.mxu0 0.0
        %526 = vmatpush1.msra.mxu0 0.0
        %527 = vmatprep.mubr.f32.mxu0 0.0
        %v528 = vand.u32 %v283, 4294901760
        %v529 = vsub.f32 %v283, %v528
        %530 = vmatmul.mubr.f32.gmra.mrb[0].mxu0 %v529
        %v531 = vpop.f32.mrb[0].mxu0
        %v532 = vadd.f32 %v452, %v531
        %v533 = vpop.f32.mrb[0].mxu0
        %534 = vdwg.mxu0
        %535 = vmatprep.subr.mxu0 0.0
        %v536 = vand.u32 %v277, 4294901760
        %537 = vmatpush1.msra.mxu0 %v536
        %538 = vmatprep.subr.mxu0 0.0
        %v539 = vand.u32 %v278, 4294901760
        %540 = vmatpush1.msra.mxu0 %v539
        %541 = vmatprep.subr.mxu0 0.0
        %v542 = vand.u32 %v279, 4294901760
        %543 = vmatpush1.msra.mxu0 %v542
        %544 = vmatprep.subr.mxu0 0.0
        %v545 = vand.u32 %v280, 4294901760
        %546 = vmatpush1.msra.mxu0 %v545
        %547 = vmatprep.subr.mxu0 0.0
        %548 = vmatpush1.msra.mxu0 0.0
        %549 = vmatprep.subr.mxu0 0.0
        %550 = vmatpush1.msra.mxu0 0.0
        %551 = vmatprep.subr.mxu0 0.0
        %552 = vmatpush1.msra.mxu0 0.0
        %553 = vmatprep.subr.mxu0 0.0
        %554 = vmatpush1.msra.mxu0 0.0
        %555 = vmatprep.subr.mxu0 0.0
        %556 = vmatpush1.msra.mxu0 0.0
        %557 = vmatprep.subr.mxu0 0.0
        %558 = vmatpush1.msra.mxu0 0.0
        %559 = vmatprep.subr.mxu0 0.0
        %560 = vmatpush1.msra.mxu0 0.0
        %561 = vmatprep.subr.mxu0 0.0
        %562 = vmatpush1.msra.mxu0 0.0
        %563 = vmatprep.subr.mxu0 0.0
        %564 = vmatpush1.msra.mxu0 0.0
        %565 = vmatprep.subr.mxu0 0.0
        %566 = vmatpush1.msra.mxu0 0.0
        %567 = vmatprep.subr.mxu0 0.0
        %568 = vmatpush1.msra.mxu0 0.0
        %569 = vmatprep.subr.mxu0 0.0
        %570 = vmatpush1.msra.mxu0 0.0
        %571 = vmatprep.subr.mxu0 0.0
        %572 = vmatpush1.msra.mxu0 0.0
        %573 = vmatprep.subr.mxu0 0.0
        %574 = vmatpush1.msra.mxu0 0.0
        %575 = vmatprep.subr.mxu0 0.0
        %576 = vmatpush1.msra.mxu0 0.0
        %577 = vmatprep.subr.mxu0 0.0
        %578 = vmatpush1.msra.mxu0 0.0
        %579 = vmatprep.subr.mxu0 0.0
        %580 = vmatpush1.msra.mxu0 0.0
        %581 = vmatprep.subr.mxu0 0.0
        %582 = vmatpush1.msra.mxu0 0.0
        %583 = vmatprep.subr.mxu0 0.0
        %584 = vmatpush1.msra.mxu0 0.0
        %585 = vmatprep.subr.mxu0 0.0
        %586 = vmatpush1.msra.mxu0 0.0
        %587 = vmatprep.subr.mxu0 0.0
        %588 = vmatpush1.msra.mxu0 0.0
        %589 = vmatprep.subr.mxu0 0.0
        %590 = vmatpush1.msra.mxu0 0.0
        %591 = vmatprep.subr.mxu0 0.0
        %592 = vmatpush1.msra.mxu0 0.0
        %593 = vmatprep.subr.mxu0 0.0
        %594 = vmatpush1.msra.mxu0 0.0
        %595 = vmatprep.subr.mxu0 0.0
        %596 = vmatpush1.msra.mxu0 0.0
        %597 = vmatprep.subr.mxu0 0.0
        %598 = vmatpush1.msra.mxu0 0.0
        %599 = vmatprep.subr.mxu0 0.0
        %600 = vmatpush1.msra.mxu0 0.0
        %601 = vmatprep.subr.mxu0 0.0
        %602 = vmatpush1.msra.mxu0 0.0
        %603 = vmatprep.mubr.f32.mxu0 0.0
        %v604 = vand.u32 %v283, 4294901760
        %v605 = vsub.f32 %v283, %v604
        %v606 = vand.u32 %v605, 4294901760
        %607 = vmatmul.mubr.f32.gmra.mrb[0].mxu0 %v606
        %v608 = vpop.f32.mrb[0].mxu0
        %v609 = vadd.f32 %v532, %v608
        %v610 = vpop.f32.mrb[0].mxu0
        %611 = vdwg.mxu0
        %612 = vmatprep.subr.mxu0 0.0
        %v613 = vand.u32 %v277, 4294901760
        %v614 = vsub.f32 %v277, %v613
        %v615 = vand.u32 %v614, 4294901760
        %616 = vmatpush1.msra.mxu0 %v615
        %617 = vmatprep.subr.mxu0 0.0
        %v618 = vand.u32 %v278, 4294901760
        %v619 = vsub.f32 %v278, %v618
        %v620 = vand.u32 %v619, 4294901760
        %621 = vmatpush1.msra.mxu0 %v620
        %622 = vmatprep.subr.mxu0 0.0
        %v623 = vand.u32 %v279, 4294901760
        %v624 = vsub.f32 %v279, %v623
        %v625 = vand.u32 %v624, 4294901760
        %626 = vmatpush1.msra.mxu0 %v625
        %627 = vmatprep.subr.mxu0 0.0
        %v628 = vand.u32 %v280, 4294901760
        %v629 = vsub.f32 %v280, %v628
        %v630 = vand.u32 %v629, 4294901760
        %631 = vmatpush1.msra.mxu0 %v630
        %632 = vmatprep.subr.mxu0 0.0
        %633 = vmatpush1.msra.mxu0 0.0
        %634 = vmatprep.subr.mxu0 0.0
        %635 = vmatpush1.msra.mxu0 0.0
        %636 = vmatprep.subr.mxu0 0.0
        %637 = vmatpush1.msra.mxu0 0.0
        %638 = vmatprep.subr.mxu0 0.0
        %639 = vmatpush1.msra.mxu0 0.0
        %640 = vmatprep.subr.mxu0 0.0
        %641 = vmatpush1.msra.mxu0 0.0
        %642 = vmatprep.subr.mxu0 0.0
        %643 = vmatpush1.msra.mxu0 0.0
        %644 = vmatprep.subr.mxu0 0.0
        %645 = vmatpush1.msra.mxu0 0.0
        %646 = vmatprep.subr.mxu0 0.0
        %647 = vmatpush1.msra.mxu0 0.0
        %648 = vmatprep.subr.mxu0 0.0
        %649 = vmatpush1.msra.mxu0 0.0
        %650 = vmatprep.subr.mxu0 0.0
        %651 = vmatpush1.msra.mxu0 0.0
        %652 = vmatprep.subr.mxu0 0.0
        %653 = vmatpush1.msra.mxu0 0.0
        %654 = vmatprep.subr.mxu0 0.0
        %655 = vmatpush1.msra.mxu0 0.0
        %656 = vmatprep.subr.mxu0 0.0
        %657 = vmatpush1.msra.mxu0 0.0
        %658 = vmatprep.subr.mxu0 0.0
        %659 = vmatpush1.msra.mxu0 0.0
        %660 = vmatprep.subr.mxu0 0.0
        %661 = vmatpush1.msra.mxu0 0.0
        %662 = vmatprep.subr.mxu0 0.0
        %663 = vmatpush1.msra.mxu0 0.0
        %664 = vmatprep.subr.mxu0 0.0
        %665 = vmatpush1.msra.mxu0 0.0
        %666 = vmatprep.subr.mxu0 0.0
        %667 = vmatpush1.msra.mxu0 0.0
        %668 = vmatprep.subr.mxu0 0.0
        %669 = vmatpush1.msra.mxu0 0.0
        %670 = vmatprep.subr.mxu0 0.0
        %671 = vmatpush1.msra.mxu0 0.0
        %672 = vmatprep.subr.mxu0 0.0
        %673 = vmatpush1.msra.mxu0 0.0
        %674 = vmatprep.subr.mxu0 0.0
        %675 = vmatpush1.msra.mxu0 0.0
        %676 = vmatprep.subr.mxu0 0.0
        %677 = vmatpush1.msra.mxu0 0.0
        %678 = vmatprep.subr.mxu0 0.0
        %679 = vmatpush1.msra.mxu0 0.0
        %680 = vmatprep.subr.mxu0 0.0
        %681 = vmatpush1.msra.mxu0 0.0
        %682 = vmatprep.subr.mxu0 0.0
        %683 = vmatpush1.msra.mxu0 0.0
        %684 = vmatprep.subr.mxu0 0.0
        %685 = vmatpush1.msra.mxu0 0.0
        %686 = vmatprep.subr.mxu0 0.0
        %687 = vmatpush1.msra.mxu0 0.0
        %688 = vmatprep.mubr.f32.mxu0 0.0
        %v689 = vand.u32 %v283, 4294901760
        %690 = vmatmul.mubr.f32.gmra.mrb[0].mxu0 %v689
        %v691 = vpop.f32.mrb[0].mxu0
        %v692 = vadd.f32 %v609, %v691
        %v693 = vpop.f32.mrb[0].mxu0
        %694 = vdwg.mxu0
        %695 = vmatprep.subr.mxu0 0.0
        %v696 = vand.u32 %v277, 4294901760
        %697 = vmatpush1.msra.mxu0 %v696
        %698 = vmatprep.subr.mxu0 0.0
        %v699 = vand.u32 %v278, 4294901760
        %700 = vmatpush1.msra.mxu0 %v699
        %701 = vmatprep.subr.mxu0 0.0
        %v702 = vand.u32 %v279, 4294901760
        %703 = vmatpush1.msra.mxu0 %v702
        %704 = vmatprep.subr.mxu0 0.0
        %v705 = vand.u32 %v280, 4294901760
        %706 = vmatpush1.msra.mxu0 %v705
        %707 = vmatprep.subr.mxu0 0.0
        %708 = vmatpush1.msra.mxu0 0.0
        %709 = vmatprep.subr.mxu0 0.0
        %710 = vmatpush1.msra.mxu0 0.0
        %711 = vmatprep.subr.mxu0 0.0
        %712 = vmatpush1.msra.mxu0 0.0
        %713 = vmatprep.subr.mxu0 0.0
        %714 = vmatpush1.msra.mxu0 0.0
        %715 = vmatprep.subr.mxu0 0.0
        %716 = vmatpush1.msra.mxu0 0.0
        %717 = vmatprep.subr.mxu0 0.0
        %718 = vmatpush1.msra.mxu0 0.0
        %719 = vmatprep.subr.mxu0 0.0
        %720 = vmatpush1.msra.mxu0 0.0
        %721 = vmatprep.subr.mxu0 0.0
        %722 = vmatpush1.msra.mxu0 0.0
        %723 = vmatprep.subr.mxu0 0.0
        %724 = vmatpush1.msra.mxu0 0.0
        %725 = vmatprep.subr.mxu0 0.0
        %726 = vmatpush1.msra.mxu0 0.0
        %727 = vmatprep.subr.mxu0 0.0
        %728 = vmatpush1.msra.mxu0 0.0
        %729 = vmatprep.subr.mxu0 0.0
        %730 = vmatpush1.msra.mxu0 0.0
        %731 = vmatprep.subr.mxu0 0.0
        %732 = vmatpush1.msra.mxu0 0.0
        %733 = vmatprep.subr.mxu0 0.0
        %734 = vmatpush1.msra.mxu0 0.0
        %735 = vmatprep.subr.mxu0 0.0
        %736 = vmatpush1.msra.mxu0 0.0
        %737 = vmatprep.subr.mxu0 0.0
        %738 = vmatpush1.msra.mxu0 0.0
        %739 = vmatprep.subr.mxu0 0.0
        %740 = vmatpush1.msra.mxu0 0.0
        %741 = vmatprep.subr.mxu0 0.0
        %742 = vmatpush1.msra.mxu0 0.0
        %743 = vmatprep.subr.mxu0 0.0
        %744 = vmatpush1.msra.mxu0 0.0
        %745 = vmatprep.subr.mxu0 0.0
        %746 = vmatpush1.msra.mxu0 0.0
        %747 = vmatprep.subr.mxu0 0.0
        %748 = vmatpush1.msra.mxu0 0.0
        %749 = vmatprep.subr.mxu0 0.0
        %750 = vmatpush1.msra.mxu0 0.0
        %751 = vmatprep.subr.mxu0 0.0
        %752 = vmatpush1.msra.mxu0 0.0
        %753 = vmatprep.subr.mxu0 0.0
        %754 = vmatpush1.msra.mxu0 0.0
        %755 = vmatprep.subr.mxu0 0.0
        %756 = vmatpush1.msra.mxu0 0.0
        %757 = vmatprep.subr.mxu0 0.0
        %758 = vmatpush1.msra.mxu0 0.0
        %759 = vmatprep.subr.mxu0 0.0
        %760 = vmatpush1.msra.mxu0 0.0
        %761 = vmatprep.subr.mxu0 0.0
        %762 = vmatpush1.msra.mxu0 0.0
        %763 = vmatprep.mubr.f32.mxu0 0.0
        %v764 = vand.u32 %v283, 4294901760
        %765 = vmatmul.mubr.f32.gmra.mrb[0].mxu0 %v764
        %v766 = vpop.f32.mrb[0].mxu0
        %v767 = vadd.f32 %v692, %v766
        %v768 = vpop.f32.mrb[0].mxu0
        %769 = vdwg.mxu0
        %v770 = vld [vmem:[%s4] sm:$0xff]
        %vm771 = vcmask 64512
        %v773 = vsel %vm771, %v770, 0
        %775 = vmatprep.subr.mxu0 0.0
        %v776 = vand.u32 %v767, 4294901760
        %777 = vmatpush1.msra.mxu0 %v776
        %778 = vmatprep.subr.mxu0 0.0
        %779 = vmatpush1.msra.mxu0 0.0
        %780 = vmatprep.subr.mxu0 0.0
        %781 = vmatpush1.msra.mxu0 0.0
        %782 = vmatprep.subr.mxu0 0.0
        %783 = vmatpush1.msra.mxu0 0.0
        %784 = vmatprep.subr.mxu0 0.0
        %785 = vmatpush1.msra.mxu0 0.0
        %786 = vmatprep.subr.mxu0 0.0
        %787 = vmatpush1.msra.mxu0 0.0
        %788 = vmatprep.subr.mxu0 0.0
        %789 = vmatpush1.msra.mxu0 0.0
        %790 = vmatprep.subr.mxu0 0.0
        %791 = vmatpush1.msra.mxu0 0.0
        %792 = vmatprep.subr.mxu0 0.0
        %793 = vmatpush1.msra.mxu0 0.0
        %794 = vmatprep.subr.mxu0 0.0
        %795 = vmatpush1.msra.mxu0 0.0
        %796 = vmatprep.subr.mxu0 0.0
        %797 = vmatpush1.msra.mxu0 0.0
        %798 = vmatprep.subr.mxu0 0.0
        %799 = vmatpush1.msra.mxu0 0.0
        %800 = vmatprep.subr.mxu0 0.0
        %801 = vmatpush1.msra.mxu0 0.0
        %802 = vmatprep.subr.mxu0 0.0
        %803 = vmatpush1.msra.mxu0 0.0
        %804 = vmatprep.subr.mxu0 0.0
        %805 = vmatpush1.msra.mxu0 0.0
        %806 = vmatprep.subr.mxu0 0.0
        %807 = vmatpush1.msra.mxu0 0.0
        %808 = vmatprep.subr.mxu0 0.0
        %809 = vmatpush1.msra.mxu0 0.0
        %810 = vmatprep.subr.mxu0 0.0
        %811 = vmatpush1.msra.mxu0 0.0
        %812 = vmatprep.subr.mxu0 0.0
        %813 = vmatpush1.msra.mxu0 0.0
        %814 = vmatprep.subr.mxu0 0.0
        %815 = vmatpush1.msra.mxu0 0.0
        %816 = vmatprep.subr.mxu0 0.0
        %817 = vmatpush1.msra.mxu0 0.0
        %818 = vmatprep.subr.mxu0 0.0
        %819 = vmatpush1.msra.mxu0 0.0
        %820 = vmatprep.subr.mxu0 0.0
        %821 = vmatpush1.msra.mxu0 0.0
        %822 = vmatprep.subr.mxu0 0.0
        %823 = vmatpush1.msra.mxu0 0.0
        %824 = vmatprep.subr.mxu0 0.0
        %825 = vmatpush1.msra.mxu0 0.0
        %826 = vmatprep.subr.mxu0 0.0
        %827 = vmatpush1.msra.mxu0 0.0
        %828 = vmatprep.subr.mxu0 0.0
        %829 = vmatpush1.msra.mxu0 0.0
        %830 = vmatprep.subr.mxu0 0.0
        %831 = vmatpush1.msra.mxu0 0.0
        %832 = vmatprep.subr.mxu0 0.0
        %833 = vmatpush1.msra.mxu0 0.0
        %834 = vmatprep.subr.mxu0 0.0
        %835 = vmatpush1.msra.mxu0 0.0
        %836 = vmatprep.subr.mxu0 0.0
        %837 = vmatpush1.msra.mxu0 0.0
        %838 = vmatprep.subr.mxu0 0.0
        %839 = vmatpush1.msra.mxu0 0.0
        %840 = vmatprep.mubr.f32.mxu0 0.0
        %v841 = vand.u32 %v773, 4294901760
        %v842 = vsub.f32 %v773, %v841
        %v843 = vand.u32 %v842, 4294901760
        %v844 = vsub.f32 %v842, %v843
        %v845 = vand.u32 %v844, 4294901760
        %846 = vmatmul.mubr.f32.gmra.mrb[0].mxu0 %v845
        %v847 = vpop.f32.mrb[0].mxu0
        %v848 = vadd.f32 0.0, %v847
        %v849 = vpop.f32.mrb[0].mxu0
        %850 = vdwg.mxu0
        %851 = vmatprep.subr.mxu0 0.0
        %v852 = vand.u32 %v767, 4294901760
        %v853 = vsub.f32 %v767, %v852
        %v854 = vand.u32 %v853, 4294901760
        %v855 = vsub.f32 %v853, %v854
        %v856 = vand.u32 %v855, 4294901760
        %857 = vmatpush1.msra.mxu0 %v856
        %858 = vmatprep.subr.mxu0 0.0
        %859 = vmatpush1.msra.mxu0 0.0
        %860 = vmatprep.subr.mxu0 0.0
        %861 = vmatpush1.msra.mxu0 0.0
        %862 = vmatprep.subr.mxu0 0.0
        %863 = vmatpush1.msra.mxu0 0.0
        %864 = vmatprep.subr.mxu0 0.0
        %865 = vmatpush1.msra.mxu0 0.0
        %866 = vmatprep.subr.mxu0 0.0
        %867 = vmatpush1.msra.mxu0 0.0
        %868 = vmatprep.subr.mxu0 0.0
        %869 = vmatpush1.msra.mxu0 0.0
        %870 = vmatprep.subr.mxu0 0.0
        %871 = vmatpush1.msra.mxu0 0.0
        %872 = vmatprep.subr.mxu0 0.0
        %873 = vmatpush1.msra.mxu0 0.0
        %874 = vmatprep.subr.mxu0 0.0
        %875 = vmatpush1.msra.mxu0 0.0
        %876 = vmatprep.subr.mxu0 0.0
        %877 = vmatpush1.msra.mxu0 0.0
        %878 = vmatprep.subr.mxu0 0.0
        %879 = vmatpush1.msra.mxu0 0.0
        %880 = vmatprep.subr.mxu0 0.0
        %881 = vmatpush1.msra.mxu0 0.0
        %882 = vmatprep.subr.mxu0 0.0
        %883 = vmatpush1.msra.mxu0 0.0
        %884 = vmatprep.subr.mxu0 0.0
        %885 = vmatpush1.msra.mxu0 0.0
        %886 = vmatprep.subr.mxu0 0.0
        %887 = vmatpush1.msra.mxu0 0.0
        %888 = vmatprep.subr.mxu0 0.0
        %889 = vmatpush1.msra.mxu0 0.0
        %890 = vmatprep.subr.mxu0 0.0
        %891 = vmatpush1.msra.mxu0 0.0
        %892 = vmatprep.subr.mxu0 0.0
        %893 = vmatpush1.msra.mxu0 0.0
        %894 = vmatprep.subr.mxu0 0.0
        %895 = vmatpush1.msra.mxu0 0.0
        %896 = vmatprep.subr.mxu0 0.0
        %897 = vmatpush1.msra.mxu0 0.0
        %898 = vmatprep.subr.mxu0 0.0
        %899 = vmatpush1.msra.mxu0 0.0
        %900 = vmatprep.subr.mxu0 0.0
        %901 = vmatpush1.msra.mxu0 0.0
        %902 = vmatprep.subr.mxu0 0.0
        %903 = vmatpush1.msra.mxu0 0.0
        %904 = vmatprep.subr.mxu0 0.0
        %905 = vmatpush1.msra.mxu0 0.0
        %906 = vmatprep.subr.mxu0 0.0
        %907 = vmatpush1.msra.mxu0 0.0
        %908 = vmatprep.subr.mxu0 0.0
        %909 = vmatpush1.msra.mxu0 0.0
        %910 = vmatprep.subr.mxu0 0.0
        %911 = vmatpush1.msra.mxu0 0.0
        %912 = vmatprep.subr.mxu0 0.0
        %913 = vmatpush1.msra.mxu0 0.0
        %914 = vmatprep.subr.mxu0 0.0
        %915 = vmatpush1.msra.mxu0 0.0
        %916 = vmatprep.subr.mxu0 0.0
        %917 = vmatpush1.msra.mxu0 0.0
        %918 = vmatprep.subr.mxu0 0.0
        %919 = vmatpush1.msra.mxu0 0.0
        %920 = vmatprep.mubr.f32.mxu0 0.0
        %v921 = vand.u32 %v773, 4294901760
        %922 = vmatmul.mubr.f32.gmra.mrb[0].mxu0 %v921
        %v923 = vpop.f32.mrb[0].mxu0
        %v924 = vadd.f32 %v848, %v923
        %v925 = vpop.f32.mrb[0].mxu0
        %926 = vdwg.mxu0
        %927 = vmatprep.subr.mxu0 0.0
        %v928 = vand.u32 %v767, 4294901760
        %v929 = vsub.f32 %v767, %v928
        %930 = vmatpush1.msra.mxu0 %v929
        %931 = vmatprep.subr.mxu0 0.0
        %932 = vmatpush1.msra.mxu0 0.0
        %933 = vmatprep.subr.mxu0 0.0
        %934 = vmatpush1.msra.mxu0 0.0
        %935 = vmatprep.subr.mxu0 0.0
        %936 = vmatpush1.msra.mxu0 0.0
        %937 = vmatprep.subr.mxu0 0.0
        %938 = vmatpush1.msra.mxu0 0.0
        %939 = vmatprep.subr.mxu0 0.0
        %940 = vmatpush1.msra.mxu0 0.0
        %941 = vmatprep.subr.mxu0 0.0
        %942 = vmatpush1.msra.mxu0 0.0
        %943 = vmatprep.subr.mxu0 0.0
        %944 = vmatpush1.msra.mxu0 0.0
        %945 = vmatprep.subr.mxu0 0.0
        %946 = vmatpush1.msra.mxu0 0.0
        %947 = vmatprep.subr.mxu0 0.0
        %948 = vmatpush1.msra.mxu0 0.0
        %949 = vmatprep.subr.mxu0 0.0
        %950 = vmatpush1.msra.mxu0 0.0
        %951 = vmatprep.subr.mxu0 0.0
        %952 = vmatpush1.msra.mxu0 0.0
        %953 = vmatprep.subr.mxu0 0.0
        %954 = vmatpush1.msra.mxu0 0.0
        %955 = vmatprep.subr.mxu0 0.0
        %956 = vmatpush1.msra.mxu0 0.0
        %957 = vmatprep.subr.mxu0 0.0
        %958 = vmatpush1.msra.mxu0 0.0
        %959 = vmatprep.subr.mxu0 0.0
        %960 = vmatpush1.msra.mxu0 0.0
        %961 = vmatprep.subr.mxu0 0.0
        %962 = vmatpush1.msra.mxu0 0.0
        %963 = vmatprep.subr.mxu0 0.0
        %964 = vmatpush1.msra.mxu0 0.0
        %965 = vmatprep.subr.mxu0 0.0
        %966 = vmatpush1.msra.mxu0 0.0
        %967 = vmatprep.subr.mxu0 0.0
        %968 = vmatpush1.msra.mxu0 0.0
        %969 = vmatprep.subr.mxu0 0.0
        %970 = vmatpush1.msra.mxu0 0.0
        %971 = vmatprep.subr.mxu0 0.0
        %972 = vmatpush1.msra.mxu0 0.0
        %973 = vmatprep.subr.mxu0 0.0
        %974 = vmatpush1.msra.mxu0 0.0
        %975 = vmatprep.subr.mxu0 0.0
        %976 = vmatpush1.msra.mxu0 0.0
        %977 = vmatprep.subr.mxu0 0.0
        %978 = vmatpush1.msra.mxu0 0.0
        %979 = vmatprep.subr.mxu0 0.0
        %980 = vmatpush1.msra.mxu0 0.0
        %981 = vmatprep.subr.mxu0 0.0
        %982 = vmatpush1.msra.mxu0 0.0
        %983 = vmatprep.subr.mxu0 0.0
        %984 = vmatpush1.msra.mxu0 0.0
        %985 = vmatprep.subr.mxu0 0.0
        %986 = vmatpush1.msra.mxu0 0.0
        %987 = vmatprep.subr.mxu0 0.0
        %988 = vmatpush1.msra.mxu0 0.0
        %989 = vmatprep.subr.mxu0 0.0
        %990 = vmatpush1.msra.mxu0 0.0
        %991 = vmatprep.subr.mxu0 0.0
        %992 = vmatpush1.msra.mxu0 0.0
        %993 = vmatprep.mubr.f32.mxu0 0.0
        %v994 = vand.u32 %v773, 4294901760
        %v995 = vsub.f32 %v773, %v994
        %996 = vmatmul.mubr.f32.gmra.mrb[0].mxu0 %v995
        %v997 = vpop.f32.mrb[0].mxu0
        %v998 = vadd.f32 %v924, %v997
        %v999 = vpop.f32.mrb[0].mxu0
        %1000 = vdwg.mxu0
        %1001 = vmatprep.subr.mxu0 0.0
        %v1002 = vand.u32 %v767, 4294901760
        %1003 = vmatpush1.msra.mxu0 %v1002
        %1004 = vmatprep.subr.mxu0 0.0
        %1005 = vmatpush1.msra.mxu0 0.0
        %1006 = vmatprep.subr.mxu0 0.0
        %1007 = vmatpush1.msra.mxu0 0.0
        %1008 = vmatprep.subr.mxu0 0.0
        %1009 = vmatpush1.msra.mxu0 0.0
        %1010 = vmatprep.subr.mxu0 0.0
        %1011 = vmatpush1.msra.mxu0 0.0
        %1012 = vmatprep.subr.mxu0 0.0
        %1013 = vmatpush1.msra.mxu0 0.0
        %1014 = vmatprep.subr.mxu0 0.0
        %1015 = vmatpush1.msra.mxu0 0.0
        %1016 = vmatprep.subr.mxu0 0.0
        %1017 = vmatpush1.msra.mxu0 0.0
        %1018 = vmatprep.subr.mxu0 0.0
        %1019 = vmatpush1.msra.mxu0 0.0
        %1020 = vmatprep.subr.mxu0 0.0
        %1021 = vmatpush1.msra.mxu0 0.0
        %1022 = vmatprep.subr.mxu0 0.0
        %1023 = vmatpush1.msra.mxu0 0.0
        %1024 = vmatprep.subr.mxu0 0.0
        %1025 = vmatpush1.msra.mxu0 0.0
        %1026 = vmatprep.subr.mxu0 0.0
        %1027 = vmatpush1.msra.mxu0 0.0
        %1028 = vmatprep.subr.mxu0 0.0
        %1029 = vmatpush1.msra.mxu0 0.0
        %1030 = vmatprep.subr.mxu0 0.0
        %1031 = vmatpush1.msra.mxu0 0.0
        %1032 = vmatprep.subr.mxu0 0.0
        %1033 = vmatpush1.msra.mxu0 0.0
        %1034 = vmatprep.subr.mxu0 0.0
        %1035 = vmatpush1.msra.mxu0 0.0
        %1036 = vmatprep.subr.mxu0 0.0
        %1037 = vmatpush1.msra.mxu0 0.0
        %1038 = vmatprep.subr.mxu0 0.0
        %1039 = vmatpush1.msra.mxu0 0.0
        %1040 = vmatprep.subr.mxu0 0.0
        %1041 = vmatpush1.msra.mxu0 0.0
        %1042 = vmatprep.subr.mxu0 0.0
        %1043 = vmatpush1.msra.mxu0 0.0
        %1044 = vmatprep.subr.mxu0 0.0
        %1045 = vmatpush1.msra.mxu0 0.0
        %1046 = vmatprep.subr.mxu0 0.0
        %1047 = vmatpush1.msra.mxu0 0.0
        %1048 = vmatprep.subr.mxu0 0.0
        %1049 = vmatpush1.msra.mxu0 0.0
        %1050 = vmatprep.subr.mxu0 0.0
        %1051 = vmatpush1.msra.mxu0 0.0
        %1052 = vmatprep.subr.mxu0 0.0
        %1053 = vmatpush1.msra.mxu0 0.0
        %1054 = vmatprep.subr.mxu0 0.0
        %1055 = vmatpush1.msra.mxu0 0.0
        %1056 = vmatprep.subr.mxu0 0.0
        %1057 = vmatpush1.msra.mxu0 0.0
        %1058 = vmatprep.subr.mxu0 0.0
        %1059 = vmatpush1.msra.mxu0 0.0
        %1060 = vmatprep.subr.mxu0 0.0
        %1061 = vmatpush1.msra.mxu0 0.0
        %1062 = vmatprep.subr.mxu0 0.0
        %1063 = vmatpush1.msra.mxu0 0.0
        %1064 = vmatprep.subr.mxu0 0.0
        %1065 = vmatpush1.msra.mxu0 0.0
        %1066 = vmatprep.mubr.f32.mxu0 0.0
        %v1067 = vand.u32 %v773, 4294901760
        %v1068 = vsub.f32 %v773, %v1067
        %v1069 = vand.u32 %v1068, 4294901760
        %1070 = vmatmul.mubr.f32.gmra.mrb[0].mxu0 %v1069
        %v1071 = vpop.f32.mrb[0].mxu0
        %v1072 = vadd.f32 %v998, %v1071
        %v1073 = vpop.f32.mrb[0].mxu0
        %1074 = vdwg.mxu0
        %1075 = vmatprep.subr.mxu0 0.0
        %v1076 = vand.u32 %v767, 4294901760
        %v1077 = vsub.f32 %v767, %v1076
        %v1078 = vand.u32 %v1077, 4294901760
        %1079 = vmatpush1.msra.mxu0 %v1078
        %1080 = vmatprep.subr.mxu0 0.0
        %1081 = vmatpush1.msra.mxu0 0.0
        %1082 = vmatprep.subr.mxu0 0.0
        %1083 = vmatpush1.msra.mxu0 0.0
        %1084 = vmatprep.subr.mxu0 0.0
        %1085 = vmatpush1.msra.mxu0 0.0
        %1086 = vmatprep.subr.mxu0 0.0
        %1087 = vmatpush1.msra.mxu0 0.0
        %1088 = vmatprep.subr.mxu0 0.0
        %1089 = vmatpush1.msra.mxu0 0.0
        %1090 = vmatprep.subr.mxu0 0.0
        %1091 = vmatpush1.msra.mxu0 0.0
        %1092 = vmatprep.subr.mxu0 0.0
        %1093 = vmatpush1.msra.mxu0 0.0
        %1094 = vmatprep.subr.mxu0 0.0
        %1095 = vmatpush1.msra.mxu0 0.0
        %1096 = vmatprep.subr.mxu0 0.0
        %1097 = vmatpush1.msra.mxu0 0.0
        %1098 = vmatprep.subr.mxu0 0.0
        %1099 = vmatpush1.msra.mxu0 0.0
        %1100 = vmatprep.subr.mxu0 0.0
        %1101 = vmatpush1.msra.mxu0 0.0
        %1102 = vmatprep.subr.mxu0 0.0
        %1103 = vmatpush1.msra.mxu0 0.0
        %1104 = vmatprep.subr.mxu0 0.0
        %1105 = vmatpush1.msra.mxu0 0.0
        %1106 = vmatprep.subr.mxu0 0.0
        %1107 = vmatpush1.msra.mxu0 0.0
        %1108 = vmatprep.subr.mxu0 0.0
        %1109 = vmatpush1.msra.mxu0 0.0
        %1110 = vmatprep.subr.mxu0 0.0
        %1111 = vmatpush1.msra.mxu0 0.0
        %1112 = vmatprep.subr.mxu0 0.0
        %1113 = vmatpush1.msra.mxu0 0.0
        %1114 = vmatprep.subr.mxu0 0.0
        %1115 = vmatpush1.msra.mxu0 0.0
        %1116 = vmatprep.subr.mxu0 0.0
        %1117 = vmatpush1.msra.mxu0 0.0
        %1118 = vmatprep.subr.mxu0 0.0
        %1119 = vmatpush1.msra.mxu0 0.0
        %1120 = vmatprep.subr.mxu0 0.0
        %1121 = vmatpush1.msra.mxu0 0.0
        %1122 = vmatprep.subr.mxu0 0.0
        %1123 = vmatpush1.msra.mxu0 0.0
        %1124 = vmatprep.subr.mxu0 0.0
        %1125 = vmatpush1.msra.mxu0 0.0
        %1126 = vmatprep.subr.mxu0 0.0
        %1127 = vmatpush1.msra.mxu0 0.0
        %1128 = vmatprep.subr.mxu0 0.0
        %1129 = vmatpush1.msra.mxu0 0.0
        %1130 = vmatprep.subr.mxu0 0.0
        %1131 = vmatpush1.msra.mxu0 0.0
        %1132 = vmatprep.subr.mxu0 0.0
        %1133 = vmatpush1.msra.mxu0 0.0
        %1134 = vmatprep.subr.mxu0 0.0
        %1135 = vmatpush1.msra.mxu0 0.0
        %1136 = vmatprep.subr.mxu0 0.0
        %1137 = vmatpush1.msra.mxu0 0.0
        %1138 = vmatprep.subr.mxu0 0.0
        %1139 = vmatpush1.msra.mxu0 0.0
        %1140 = vmatprep.subr.mxu0 0.0
        %1141 = vmatpush1.msra.mxu0 0.0
        %1142 = vmatprep.mubr.f32.mxu0 0.0
        %v1143 = vand.u32 %v773, 4294901760
        %1144 = vmatmul.mubr.f32.gmra.mrb[0].mxu0 %v1143
        %v1145 = vpop.f32.mrb[0].mxu0
        %v1146 = vadd.f32 %v1072, %v1145
        %v1147 = vpop.f32.mrb[0].mxu0
        %1148 = vdwg.mxu0
        %1149 = vmatprep.subr.mxu0 0.0
        %v1150 = vand.u32 %v767, 4294901760
        %1151 = vmatpush1.msra.mxu0 %v1150
        %1152 = vmatprep.subr.mxu0 0.0
        %1153 = vmatpush1.msra.mxu0 0.0
        %1154 = vmatprep.subr.mxu0 0.0
        %1155 = vmatpush1.msra.mxu0 0.0
        %1156 = vmatprep.subr.mxu0 0.0
        %1157 = vmatpush1.msra.mxu0 0.0
        %1158 = vmatprep.subr.mxu0 0.0
        %1159 = vmatpush1.msra.mxu0 0.0
        %1160 = vmatprep.subr.mxu0 0.0
        %1161 = vmatpush1.msra.mxu0 0.0
        %1162 = vmatprep.subr.mxu0 0.0
        %1163 = vmatpush1.msra.mxu0 0.0
        %1164 = vmatprep.subr.mxu0 0.0
        %1165 = vmatpush1.msra.mxu0 0.0
        %1166 = vmatprep.subr.mxu0 0.0
        %1167 = vmatpush1.msra.mxu0 0.0
        %1168 = vmatprep.subr.mxu0 0.0
        %1169 = vmatpush1.msra.mxu0 0.0
        %1170 = vmatprep.subr.mxu0 0.0
        %1171 = vmatpush1.msra.mxu0 0.0
        %1172 = vmatprep.subr.mxu0 0.0
        %1173 = vmatpush1.msra.mxu0 0.0
        %1174 = vmatprep.subr.mxu0 0.0
        %1175 = vmatpush1.msra.mxu0 0.0
        %1176 = vmatprep.subr.mxu0 0.0
        %1177 = vmatpush1.msra.mxu0 0.0
        %1178 = vmatprep.subr.mxu0 0.0
        %1179 = vmatpush1.msra.mxu0 0.0
        %1180 = vmatprep.subr.mxu0 0.0
        %1181 = vmatpush1.msra.mxu0 0.0
        %1182 = vmatprep.subr.mxu0 0.0
        %1183 = vmatpush1.msra.mxu0 0.0
        %1184 = vmatprep.subr.mxu0 0.0
        %1185 = vmatpush1.msra.mxu0 0.0
        %1186 = vmatprep.subr.mxu0 0.0
        %1187 = vmatpush1.msra.mxu0 0.0
        %1188 = vmatprep.subr.mxu0 0.0
        %1189 = vmatpush1.msra.mxu0 0.0
        %1190 = vmatprep.subr.mxu0 0.0
        %1191 = vmatpush1.msra.mxu0 0.0
        %1192 = vmatprep.subr.mxu0 0.0
        %1193 = vmatpush1.msra.mxu0 0.0
        %1194 = vmatprep.subr.mxu0 0.0
        %1195 = vmatpush1.msra.mxu0 0.0
        %1196 = vmatprep.subr.mxu0 0.0
        %1197 = vmatpush1.msra.mxu0 0.0
        %1198 = vmatprep.subr.mxu0 0.0
        %1199 = vmatpush1.msra.mxu0 0.0
        %1200 = vmatprep.subr.mxu0 0.0
        %1201 = vmatpush1.msra.mxu0 0.0
        %1202 = vmatprep.subr.mxu0 0.0
        %1203 = vmatpush1.msra.mxu0 0.0
        %1204 = vmatprep.subr.mxu0 0.0
        %1205 = vmatpush1.msra.mxu0 0.0
        %1206 = vmatprep.subr.mxu0 0.0
        %1207 = vmatpush1.msra.mxu0 0.0
        %1208 = vmatprep.subr.mxu0 0.0
        %1209 = vmatpush1.msra.mxu0 0.0
        %1210 = vmatprep.subr.mxu0 0.0
        %1211 = vmatpush1.msra.mxu0 0.0
        %1212 = vmatprep.subr.mxu0 0.0
        %1213 = vmatpush1.msra.mxu0 0.0
        %1214 = vmatprep.mubr.f32.mxu0 0.0
        %v1215 = vand.u32 %v773, 4294901760
        %1216 = vmatmul.mubr.f32.gmra.mrb[0].mxu0 %v1215
        %v1217 = vpop.f32.mrb[0].mxu0
        %v1218 = vadd.f32 %v1146, %v1217
        %v1219 = vpop.f32.mrb[0].mxu0
        %1220 = vdwg.mxu0
        %v1221 = vld [vmem:[%s268] sm:$0x1]
        %v1222 = vld [vmem:[%s5] sm:$0xff]
        %v1224 = vlaneseq
        %v1225 = vshrl.u32 %v1224, 7
        %v1226 = vsub.s32 0, %v1225
        %v1227 = vrot.slane %v1221, %v1226
        %v1229 = vmul.f32 %v1222, %v1227
        %v1230 = vsel %vm281, %v1229, 0.0
        %1231 = vadd.xlane.f32.xlu0 %v1230
        %v1232 = vpop.xlane.xlu0 %1231
        %v1233 = vsel %vm281, %v1222, 0.0
        %1234 = vadd.xlane.f32.xlu0 %v1233
        %v1235 = vpop.xlane.xlu0 %1234
        %vm1236 = vcmp.gt.f32.partialorder %v1235, 0.5
        %v1237 = vsel %vm1236, 1, 0
        %vm1238 = vcmp.eq.s32.totalorder %v1237, 1
        %v1239 = vsel %vm1238, %v1232, %v1218
        %1240 = vst.msk [vmem:[#allocation4] sm:$0xff] %vm281, %v1239
        %v1241 = vld [vmem:[%s3] sm:$0xff]
        %v1242 = vld [vmem:[%s3 + $0x8] sm:$0xff]
        %v1243 = vld [vmem:[%s3 + $0x10] sm:$0xff]
        %v1244 = vld [vmem:[%s3 + $0x18] sm:$0xff]
        %v1246 = vsel %vm281, %v1239, 0
        %1248 = vmatprep.subr.mxu0 0.0
        %v1249 = vand.u32 %v1241, 4294901760
        %1250 = vmatpush1.msra.mxu0 %v1249
        %1251 = vmatprep.subr.mxu0 0.0
        %v1252 = vand.u32 %v1242, 4294901760
        %1253 = vmatpush1.msra.mxu0 %v1252
        %1254 = vmatprep.subr.mxu0 0.0
        %v1255 = vand.u32 %v1243, 4294901760
        %1256 = vmatpush1.msra.mxu0 %v1255
        %1257 = vmatprep.subr.mxu0 0.0
        %v1258 = vand.u32 %v1244, 4294901760
        %1259 = vmatpush1.msra.mxu0 %v1258
        %1260 = vmatprep.subr.mxu0 0.0
        %1261 = vmatpush1.msra.mxu0 0.0
        %1262 = vmatprep.subr.mxu0 0.0
        %1263 = vmatpush1.msra.mxu0 0.0
        %1264 = vmatprep.subr.mxu0 0.0
        %1265 = vmatpush1.msra.mxu0 0.0
        %1266 = vmatprep.subr.mxu0 0.0
        %1267 = vmatpush1.msra.mxu0 0.0
        %1268 = vmatprep.subr.mxu0 0.0
        %1269 = vmatpush1.msra.mxu0 0.0
        %1270 = vmatprep.subr.mxu0 0.0
        %1271 = vmatpush1.msra.mxu0 0.0
        %1272 = vmatprep.subr.mxu0 0.0
        %1273 = vmatpush1.msra.mxu0 0.0
        %1274 = vmatprep.subr.mxu0 0.0
        %1275 = vmatpush1.msra.mxu0 0.0
        %1276 = vmatprep.subr.mxu0 0.0
        %1277 = vmatpush1.msra.mxu0 0.0
        %1278 = vmatprep.subr.mxu0 0.0
        %1279 = vmatpush1.msra.mxu0 0.0
        %1280 = vmatprep.subr.mxu0 0.0
        %1281 = vmatpush1.msra.mxu0 0.0
        %1282 = vmatprep.subr.mxu0 0.0
        %1283 = vmatpush1.msra.mxu0 0.0
        %1284 = vmatprep.subr.mxu0 0.0
        %1285 = vmatpush1.msra.mxu0 0.0
        %1286 = vmatprep.subr.mxu0 0.0
        %1287 = vmatpush1.msra.mxu0 0.0
        %1288 = vmatprep.subr.mxu0 0.0
        %1289 = vmatpush1.msra.mxu0 0.0
        %1290 = vmatprep.subr.mxu0 0.0
        %1291 = vmatpush1.msra.mxu0 0.0
        %1292 = vmatprep.subr.mxu0 0.0
        %1293 = vmatpush1.msra.mxu0 0.0
        %1294 = vmatprep.subr.mxu0 0.0
        %1295 = vmatpush1.msra.mxu0 0.0
        %1296 = vmatprep.subr.mxu0 0.0
        %1297 = vmatpush1.msra.mxu0 0.0
        %1298 = vmatprep.subr.mxu0 0.0
        %1299 = vmatpush1.msra.mxu0 0.0
        %1300 = vmatprep.subr.mxu0 0.0
        %1301 = vmatpush1.msra.mxu0 0.0
        %1302 = vmatprep.subr.mxu0 0.0
        %1303 = vmatpush1.msra.mxu0 0.0
        %1304 = vmatprep.subr.mxu0 0.0
        %1305 = vmatpush1.msra.mxu0 0.0
        %1306 = vmatprep.subr.mxu0 0.0
        %1307 = vmatpush1.msra.mxu0 0.0
        %1308 = vmatprep.subr.mxu0 0.0
        %1309 = vmatpush1.msra.mxu0 0.0
        %1310 = vmatprep.subr.mxu0 0.0
        %1311 = vmatpush1.msra.mxu0 0.0
        %1312 = vmatprep.subr.mxu0 0.0
        %1313 = vmatpush1.msra.mxu0 0.0
        %1314 = vmatprep.subr.mxu0 0.0
        %1315 = vmatpush1.msra.mxu0 0.0
        %1316 = vmatprep.mubr.f32.mxu0 0.0
        %v1317 = vand.u32 %v1246, 4294901760
        %v1318 = vsub.f32 %v1246, %v1317
        %v1319 = vand.u32 %v1318, 4294901760
        %v1320 = vsub.f32 %v1318, %v1319
        %v1321 = vand.u32 %v1320, 4294901760
        %1322 = vmatmul.mubr.f32.gmra.mrb[0].mxu0 %v1321
        %v1323 = vpop.f32.mrb[0].mxu0
        %v1324 = vadd.f32 0.0, %v1323
        %v1325 = vpop.f32.mrb[0].mxu0
        %1326 = vdwg.mxu0
        %1327 = vmatprep.subr.mxu0 0.0
        %v1328 = vand.u32 %v1241, 4294901760
        %v1329 = vsub.f32 %v1241, %v1328
        %v1330 = vand.u32 %v1329, 4294901760
        %v1331 = vsub.f32 %v1329, %v1330
        %v1332 = vand.u32 %v1331, 4294901760
        %1333 = vmatpush1.msra.mxu0 %v1332
        %1334 = vmatprep.subr.mxu0 0.0
        %v1335 = vand.u32 %v1242, 4294901760
        %v1336 = vsub.f32 %v1242, %v1335
        %v1337 = vand.u32 %v1336, 4294901760
        %v1338 = vsub.f32 %v1336, %v1337
        %v1339 = vand.u32 %v1338, 4294901760
        %1340 = vmatpush1.msra.mxu0 %v1339
        %1341 = vmatprep.subr.mxu0 0.0
        %v1342 = vand.u32 %v1243, 4294901760
        %v1343 = vsub.f32 %v1243, %v1342
        %v1344 = vand.u32 %v1343, 4294901760
        %v1345 = vsub.f32 %v1343, %v1344
        %v1346 = vand.u32 %v1345, 4294901760
        %1347 = vmatpush1.msra.mxu0 %v1346
        %1348 = vmatprep.subr.mxu0 0.0
        %v1349 = vand.u32 %v1244, 4294901760
        %v1350 = vsub.f32 %v1244, %v1349
        %v1351 = vand.u32 %v1350, 4294901760
        %v1352 = vsub.f32 %v1350, %v1351
        %v1353 = vand.u32 %v1352, 4294901760
        %1354 = vmatpush1.msra.mxu0 %v1353
        %1355 = vmatprep.subr.mxu0 0.0
        %1356 = vmatpush1.msra.mxu0 0.0
        %1357 = vmatprep.subr.mxu0 0.0
        %1358 = vmatpush1.msra.mxu0 0.0
        %1359 = vmatprep.subr.mxu0 0.0
        %1360 = vmatpush1.msra.mxu0 0.0
        %1361 = vmatprep.subr.mxu0 0.0
        %1362 = vmatpush1.msra.mxu0 0.0
        %1363 = vmatprep.subr.mxu0 0.0
        %1364 = vmatpush1.msra.mxu0 0.0
        %1365 = vmatprep.subr.mxu0 0.0
        %1366 = vmatpush1.msra.mxu0 0.0
        %1367 = vmatprep.subr.mxu0 0.0
        %1368 = vmatpush1.msra.mxu0 0.0
        %1369 = vmatprep.subr.mxu0 0.0
        %1370 = vmatpush1.msra.mxu0 0.0
        %1371 = vmatprep.subr.mxu0 0.0
        %1372 = vmatpush1.msra.mxu0 0.0
        %1373 = vmatprep.subr.mxu0 0.0
        %1374 = vmatpush1.msra.mxu0 0.0
        %1375 = vmatprep.subr.mxu0 0.0
        %1376 = vmatpush1.msra.mxu0 0.0
        %1377 = vmatprep.subr.mxu0 0.0
        %1378 = vmatpush1.msra.mxu0 0.0
        %1379 = vmatprep.subr.mxu0 0.0
        %1380 = vmatpush1.msra.mxu0 0.0
        %1381 = vmatprep.subr.mxu0 0.0
        %1382 = vmatpush1.msra.mxu0 0.0
        %1383 = vmatprep.subr.mxu0 0.0
        %1384 = vmatpush1.msra.mxu0 0.0
        %1385 = vmatprep.subr.mxu0 0.0
        %1386 = vmatpush1.msra.mxu0 0.0
        %1387 = vmatprep.subr.mxu0 0.0
        %1388 = vmatpush1.msra.mxu0 0.0
        %1389 = vmatprep.subr.mxu0 0.0
        %1390 = vmatpush1.msra.mxu0 0.0
        %1391 = vmatprep.subr.mxu0 0.0
        %1392 = vmatpush1.msra.mxu0 0.0
        %1393 = vmatprep.subr.mxu0 0.0
        %1394 = vmatpush1.msra.mxu0 0.0
        %1395 = vmatprep.subr.mxu0 0.0
        %1396 = vmatpush1.msra.mxu0 0.0
        %1397 = vmatprep.subr.mxu0 0.0
        %1398 = vmatpush1.msra.mxu0 0.0
        %1399 = vmatprep.subr.mxu0 0.0
        %1400 = vmatpush1.msra.mxu0 0.0
        %1401 = vmatprep.subr.mxu0 0.0
        %1402 = vmatpush1.msra.mxu0 0.0
        %1403 = vmatprep.subr.mxu0 0.0
        %1404 = vmatpush1.msra.mxu0 0.0
        %1405 = vmatprep.subr.mxu0 0.0
        %1406 = vmatpush1.msra.mxu0 0.0
        %1407 = vmatprep.subr.mxu0 0.0
        %1408 = vmatpush1.msra.mxu0 0.0
        %1409 = vmatprep.subr.mxu0 0.0
        %1410 = vmatpush1.msra.mxu0 0.0
        %1411 = vmatprep.mubr.f32.mxu0 0.0
        %v1412 = vand.u32 %v1246, 4294901760
        %1413 = vmatmul.mubr.f32.gmra.mrb[0].mxu0 %v1412
        %v1414 = vpop.f32.mrb[0].mxu0
        %v1415 = vadd.f32 %v1324, %v1414
        %v1416 = vpop.f32.mrb[0].mxu0
        %1417 = vdwg.mxu0
        %1418 = vmatprep.subr.mxu0 0.0
        %v1419 = vand.u32 %v1241, 4294901760
        %v1420 = vsub.f32 %v1241, %v1419
        %1421 = vmatpush1.msra.mxu0 %v1420
        %1422 = vmatprep.subr.mxu0 0.0
        %v1423 = vand.u32 %v1242, 4294901760
        %v1424 = vsub.f32 %v1242, %v1423
        %1425 = vmatpush1.msra.mxu0 %v1424
        %1426 = vmatprep.subr.mxu0 0.0
        %v1427 = vand.u32 %v1243, 4294901760
        %v1428 = vsub.f32 %v1243, %v1427
        %1429 = vmatpush1.msra.mxu0 %v1428
        %1430 = vmatprep.subr.mxu0 0.0
        %v1431 = vand.u32 %v1244, 4294901760
        %v1432 = vsub.f32 %v1244, %v1431
        %1433 = vmatpush1.msra.mxu0 %v1432
        %1434 = vmatprep.subr.mxu0 0.0
        %1435 = vmatpush1.msra.mxu0 0.0
        %1436 = vmatprep.subr.mxu0 0.0
        %1437 = vmatpush1.msra.mxu0 0.0
        %1438 = vmatprep.subr.mxu0 0.0
        %1439 = vmatpush1.msra.mxu0 0.0
        %1440 = vmatprep.subr.mxu0 0.0
        %1441 = vmatpush1.msra.mxu0 0.0
        %1442 = vmatprep.subr.mxu0 0.0
        %1443 = vmatpush1.msra.mxu0 0.0
        %1444 = vmatprep.subr.mxu0 0.0
        %1445 = vmatpush1.msra.mxu0 0.0
        %1446 = vmatprep.subr.mxu0 0.0
        %1447 = vmatpush1.msra.mxu0 0.0
        %1448 = vmatprep.subr.mxu0 0.0
        %1449 = vmatpush1.msra.mxu0 0.0
        %1450 = vmatprep.subr.mxu0 0.0
        %1451 = vmatpush1.msra.mxu0 0.0
        %1452 = vmatprep.subr.mxu0 0.0
        %1453 = vmatpush1.msra.mxu0 0.0
        %1454 = vmatprep.subr.mxu0 0.0
        %1455 = vmatpush1.msra.mxu0 0.0
        %1456 = vmatprep.subr.mxu0 0.0
        %1457 = vmatpush1.msra.mxu0 0.0
        %1458 = vmatprep.subr.mxu0 0.0
        %1459 = vmatpush1.msra.mxu0 0.0
        %1460 = vmatprep.subr.mxu0 0.0
        %1461 = vmatpush1.msra.mxu0 0.0
        %1462 = vmatprep.subr.mxu0 0.0
        %1463 = vmatpush1.msra.mxu0 0.0
        %1464 = vmatprep.subr.mxu0 0.0
        %1465 = vmatpush1.msra.mxu0 0.0
        %1466 = vmatprep.subr.mxu0 0.0
        %1467 = vmatpush1.msra.mxu0 0.0
        %1468 = vmatprep.subr.mxu0 0.0
        %1469 = vmatpush1.msra.mxu0 0.0
        %1470 = vmatprep.subr.mxu0 0.0
        %1471 = vmatpush1.msra.mxu0 0.0
        %1472 = vmatprep.subr.mxu0 0.0
        %1473 = vmatpush1.msra.mxu0 0.0
        %1474 = vmatprep.subr.mxu0 0.0
        %1475 = vmatpush1.msra.mxu0 0.0
        %1476 = vmatprep.subr.mxu0 0.0
        %1477 = vmatpush1.msra.mxu0 0.0
        %1478 = vmatprep.subr.mxu0 0.0
        %1479 = vmatpush1.msra.mxu0 0.0
        %1480 = vmatprep.subr.mxu0 0.0
        %1481 = vmatpush1.msra.mxu0 0.0
        %1482 = vmatprep.subr.mxu0 0.0
        %1483 = vmatpush1.msra.mxu0 0.0
        %1484 = vmatprep.subr.mxu0 0.0
        %1485 = vmatpush1.msra.mxu0 0.0
        %1486 = vmatprep.subr.mxu0 0.0
        %1487 = vmatpush1.msra.mxu0 0.0
        %1488 = vmatprep.subr.mxu0 0.0
        %1489 = vmatpush1.msra.mxu0 0.0
        %1490 = vmatprep.mubr.f32.mxu0 0.0
        %v1491 = vand.u32 %v1246, 4294901760
        %v1492 = vsub.f32 %v1246, %v1491
        %1493 = vmatmul.mubr.f32.gmra.mrb[0].mxu0 %v1492
        %v1494 = vpop.f32.mrb[0].mxu0
        %v1495 = vadd.f32 %v1415, %v1494
        %v1496 = vpop.f32.mrb[0].mxu0
        %1497 = vdwg.mxu0
        %1498 = vmatprep.subr.mxu0 0.0
        %v1499 = vand.u32 %v1241, 4294901760
        %1500 = vmatpush1.msra.mxu0 %v1499
        %1501 = vmatprep.subr.mxu0 0.0
        %v1502 = vand.u32 %v1242, 4294901760
        %1503 = vmatpush1.msra.mxu0 %v1502
        %1504 = vmatprep.subr.mxu0 0.0
        %v1505 = vand.u32 %v1243, 4294901760
        %1506 = vmatpush1.msra.mxu0 %v1505
        %1507 = vmatprep.subr.mxu0 0.0
        %v1508 = vand.u32 %v1244, 4294901760
        %1509 = vmatpush1.msra.mxu0 %v1508
        %1510 = vmatprep.subr.mxu0 0.0
        %1511 = vmatpush1.msra.mxu0 0.0
        %1512 = vmatprep.subr.mxu0 0.0
        %1513 = vmatpush1.msra.mxu0 0.0
        %1514 = vmatprep.subr.mxu0 0.0
        %1515 = vmatpush1.msra.mxu0 0.0
        %1516 = vmatprep.subr.mxu0 0.0
        %1517 = vmatpush1.msra.mxu0 0.0
        %1518 = vmatprep.subr.mxu0 0.0
        %1519 = vmatpush1.msra.mxu0 0.0
        %1520 = vmatprep.subr.mxu0 0.0
        %1521 = vmatpush1.msra.mxu0 0.0
        %1522 = vmatprep.subr.mxu0 0.0
        %1523 = vmatpush1.msra.mxu0 0.0
        %1524 = vmatprep.subr.mxu0 0.0
        %1525 = vmatpush1.msra.mxu0 0.0
        %1526 = vmatprep.subr.mxu0 0.0
        %1527 = vmatpush1.msra.mxu0 0.0
        %1528 = vmatprep.subr.mxu0 0.0
        %1529 = vmatpush1.msra.mxu0 0.0
        %1530 = vmatprep.subr.mxu0 0.0
        %1531 = vmatpush1.msra.mxu0 0.0
        %1532 = vmatprep.subr.mxu0 0.0
        %1533 = vmatpush1.msra.mxu0 0.0
        %1534 = vmatprep.subr.mxu0 0.0
        %1535 = vmatpush1.msra.mxu0 0.0
        %1536 = vmatprep.subr.mxu0 0.0
        %1537 = vmatpush1.msra.mxu0 0.0
        %1538 = vmatprep.subr.mxu0 0.0
        %1539 = vmatpush1.msra.mxu0 0.0
        %1540 = vmatprep.subr.mxu0 0.0
        %1541 = vmatpush1.msra.mxu0 0.0
        %1542 = vmatprep.subr.mxu0 0.0
        %1543 = vmatpush1.msra.mxu0 0.0
        %1544 = vmatprep.subr.mxu0 0.0
        %1545 = vmatpush1.msra.mxu0 0.0
        %1546 = vmatprep.subr.mxu0 0.0
        %1547 = vmatpush1.msra.mxu0 0.0
        %1548 = vmatprep.subr.mxu0 0.0
        %1549 = vmatpush1.msra.mxu0 0.0
        %1550 = vmatprep.subr.mxu0 0.0
        %1551 = vmatpush1.msra.mxu0 0.0
        %1552 = vmatprep.subr.mxu0 0.0
        %1553 = vmatpush1.msra.mxu0 0.0
        %1554 = vmatprep.subr.mxu0 0.0
        %1555 = vmatpush1.msra.mxu0 0.0
        %1556 = vmatprep.subr.mxu0 0.0
        %1557 = vmatpush1.msra.mxu0 0.0
        %1558 = vmatprep.subr.mxu0 0.0
        %1559 = vmatpush1.msra.mxu0 0.0
        %1560 = vmatprep.subr.mxu0 0.0
        %1561 = vmatpush1.msra.mxu0 0.0
        %1562 = vmatprep.subr.mxu0 0.0
        %1563 = vmatpush1.msra.mxu0 0.0
        %1564 = vmatprep.subr.mxu0 0.0
        %1565 = vmatpush1.msra.mxu0 0.0
        %1566 = vmatprep.mubr.f32.mxu0 0.0
        %v1567 = vand.u32 %v1246, 4294901760
        %v1568 = vsub.f32 %v1246, %v1567
        %v1569 = vand.u32 %v1568, 4294901760
        %1570 = vmatmul.mubr.f32.gmra.mrb[0].mxu0 %v1569
        %v1571 = vpop.f32.mrb[0].mxu0
        %v1572 = vadd.f32 %v1495, %v1571
        %v1573 = vpop.f32.mrb[0].mxu0
        %1574 = vdwg.mxu0
        %1575 = vmatprep.subr.mxu0 0.0
        %v1576 = vand.u32 %v1241, 4294901760
        %v1577 = vsub.f32 %v1241, %v1576
        %v1578 = vand.u32 %v1577, 4294901760
        %1579 = vmatpush1.msra.mxu0 %v1578
        %1580 = vmatprep.subr.mxu0 0.0
        %v1581 = vand.u32 %v1242, 4294901760
        %v1582 = vsub.f32 %v1242, %v1581
        %v1583 = vand.u32 %v1582, 4294901760
        %1584 = vmatpush1.msra.mxu0 %v1583
        %1585 = vmatprep.subr.mxu0 0.0
        %v1586 = vand.u32 %v1243, 4294901760
        %v1587 = vsub.f32 %v1243, %v1586
        %v1588 = vand.u32 %v1587, 4294901760
        %1589 = vmatpush1.msra.mxu0 %v1588
        %1590 = vmatprep.subr.mxu0 0.0
        %v1591 = vand.u32 %v1244, 4294901760
        %v1592 = vsub.f32 %v1244, %v1591
        %v1593 = vand.u32 %v1592, 4294901760
        %1594 = vmatpush1.msra.mxu0 %v1593
        %1595 = vmatprep.subr.mxu0 0.0
        %1596 = vmatpush1.msra.mxu0 0.0
        %1597 = vmatprep.subr.mxu0 0.0
        %1598 = vmatpush1.msra.mxu0 0.0
        %1599 = vmatprep.subr.mxu0 0.0
        %1600 = vmatpush1.msra.mxu0 0.0
        %1601 = vmatprep.subr.mxu0 0.0
        %1602 = vmatpush1.msra.mxu0 0.0
        %1603 = vmatprep.subr.mxu0 0.0
        %1604 = vmatpush1.msra.mxu0 0.0
        %1605 = vmatprep.subr.mxu0 0.0
        %1606 = vmatpush1.msra.mxu0 0.0
        %1607 = vmatprep.subr.mxu0 0.0
        %1608 = vmatpush1.msra.mxu0 0.0
        %1609 = vmatprep.subr.mxu0 0.0
        %1610 = vmatpush1.msra.mxu0 0.0
        %1611 = vmatprep.subr.mxu0 0.0
        %1612 = vmatpush1.msra.mxu0 0.0
        %1613 = vmatprep.subr.mxu0 0.0
        %1614 = vmatpush1.msra.mxu0 0.0
        %1615 = vmatprep.subr.mxu0 0.0
        %1616 = vmatpush1.msra.mxu0 0.0
        %1617 = vmatprep.subr.mxu0 0.0
        %1618 = vmatpush1.msra.mxu0 0.0
        %1619 = vmatprep.subr.mxu0 0.0
        %1620 = vmatpush1.msra.mxu0 0.0
        %1621 = vmatprep.subr.mxu0 0.0
        %1622 = vmatpush1.msra.mxu0 0.0
        %1623 = vmatprep.subr.mxu0 0.0
        %1624 = vmatpush1.msra.mxu0 0.0
        %1625 = vmatprep.subr.mxu0 0.0
        %1626 = vmatpush1.msra.mxu0 0.0
        %1627 = vmatprep.subr.mxu0 0.0
        %1628 = vmatpush1.msra.mxu0 0.0
        %1629 = vmatprep.subr.mxu0 0.0
        %1630 = vmatpush1.msra.mxu0 0.0
        %1631 = vmatprep.subr.mxu0 0.0
        %1632 = vmatpush1.msra.mxu0 0.0
        %1633 = vmatprep.subr.mxu0 0.0
        %1634 = vmatpush1.msra.mxu0 0.0
        %1635 = vmatprep.subr.mxu0 0.0
        %1636 = vmatpush1.msra.mxu0 0.0
        %1637 = vmatprep.subr.mxu0 0.0
        %1638 = vmatpush1.msra.mxu0 0.0
        %1639 = vmatprep.subr.mxu0 0.0
        %1640 = vmatpush1.msra.mxu0 0.0
        %1641 = vmatprep.subr.mxu0 0.0
        %1642 = vmatpush1.msra.mxu0 0.0
        %1643 = vmatprep.subr.mxu0 0.0
        %1644 = vmatpush1.msra.mxu0 0.0
        %1645 = vmatprep.subr.mxu0 0.0
        %1646 = vmatpush1.msra.mxu0 0.0
        %1647 = vmatprep.subr.mxu0 0.0
        %1648 = vmatpush1.msra.mxu0 0.0
        %1649 = vmatprep.subr.mxu0 0.0
        %1650 = vmatpush1.msra.mxu0 0.0
        %1651 = vmatprep.mubr.f32.mxu0 0.0
        %v1652 = vand.u32 %v1246, 4294901760
        %1653 = vmatmul.mubr.f32.gmra.mrb[0].mxu0 %v1652
        %v1654 = vpop.f32.mrb[0].mxu0
        %v1655 = vadd.f32 %v1572, %v1654
        %v1656 = vpop.f32.mrb[0].mxu0
        %1657 = vdwg.mxu0
        %1658 = vmatprep.subr.mxu0 0.0
        %v1659 = vand.u32 %v1241, 4294901760
        %1660 = vmatpush1.msra.mxu0 %v1659
        %1661 = vmatprep.subr.mxu0 0.0
        %v1662 = vand.u32 %v1242, 4294901760
        %1663 = vmatpush1.msra.mxu0 %v1662
        %1664 = vmatprep.subr.mxu0 0.0
        %v1665 = vand.u32 %v1243, 4294901760
        %1666 = vmatpush1.msra.mxu0 %v1665
        %1667 = vmatprep.subr.mxu0 0.0
        %v1668 = vand.u32 %v1244, 4294901760
        %1669 = vmatpush1.msra.mxu0 %v1668
        %1670 = vmatprep.subr.mxu0 0.0
        %1671 = vmatpush1.msra.mxu0 0.0
        %1672 = vmatprep.subr.mxu0 0.0
        %1673 = vmatpush1.msra.mxu0 0.0
        %1674 = vmatprep.subr.mxu0 0.0
        %1675 = vmatpush1.msra.mxu0 0.0
        %1676 = vmatprep.subr.mxu0 0.0
        %1677 = vmatpush1.msra.mxu0 0.0
        %1678 = vmatprep.subr.mxu0 0.0
        %1679 = vmatpush1.msra.mxu0 0.0
        %1680 = vmatprep.subr.mxu0 0.0
        %1681 = vmatpush1.msra.mxu0 0.0
        %1682 = vmatprep.subr.mxu0 0.0
        %1683 = vmatpush1.msra.mxu0 0.0
        %1684 = vmatprep.subr.mxu0 0.0
        %1685 = vmatpush1.msra.mxu0 0.0
        %1686 = vmatprep.subr.mxu0 0.0
        %1687 = vmatpush1.msra.mxu0 0.0
        %1688 = vmatprep.subr.mxu0 0.0
        %1689 = vmatpush1.msra.mxu0 0.0
        %1690 = vmatprep.subr.mxu0 0.0
        %1691 = vmatpush1.msra.mxu0 0.0
        %1692 = vmatprep.subr.mxu0 0.0
        %1693 = vmatpush1.msra.mxu0 0.0
        %1694 = vmatprep.subr.mxu0 0.0
        %1695 = vmatpush1.msra.mxu0 0.0
        %1696 = vmatprep.subr.mxu0 0.0
        %1697 = vmatpush1.msra.mxu0 0.0
        %1698 = vmatprep.subr.mxu0 0.0
        %1699 = vmatpush1.msra.mxu0 0.0
        %1700 = vmatprep.subr.mxu0 0.0
        %1701 = vmatpush1.msra.mxu0 0.0
        %1702 = vmatprep.subr.mxu0 0.0
        %1703 = vmatpush1.msra.mxu0 0.0
        %1704 = vmatprep.subr.mxu0 0.0
        %1705 = vmatpush1.msra.mxu0 0.0
        %1706 = vmatprep.subr.mxu0 0.0
        %1707 = vmatpush1.msra.mxu0 0.0
        %1708 = vmatprep.subr.mxu0 0.0
        %1709 = vmatpush1.msra.mxu0 0.0
        %1710 = vmatprep.subr.mxu0 0.0
        %1711 = vmatpush1.msra.mxu0 0.0
        %1712 = vmatprep.subr.mxu0 0.0
        %1713 = vmatpush1.msra.mxu0 0.0
        %1714 = vmatprep.subr.mxu0 0.0
        %1715 = vmatpush1.msra.mxu0 0.0
        %1716 = vmatprep.subr.mxu0 0.0
        %1717 = vmatpush1.msra.mxu0 0.0
        %1718 = vmatprep.subr.mxu0 0.0
        %1719 = vmatpush1.msra.mxu0 0.0
        %1720 = vmatprep.subr.mxu0 0.0
        %1721 = vmatpush1.msra.mxu0 0.0
        %1722 = vmatprep.subr.mxu0 0.0
        %1723 = vmatpush1.msra.mxu0 0.0
        %1724 = vmatprep.subr.mxu0 0.0
        %1725 = vmatpush1.msra.mxu0 0.0
        %1726 = vmatprep.mubr.f32.mxu0 0.0
        %v1727 = vand.u32 %v1246, 4294901760
        %1728 = vmatmul.mubr.f32.gmra.mrb[0].mxu0 %v1727
        %v1729 = vpop.f32.mrb[0].mxu0
        %v1730 = vadd.f32 %v1655, %v1729
        %v1731 = vpop.f32.mrb[0].mxu0
        %1732 = vdwg.mxu0
        %vm1733 = vcmask 122880
        %1734 = vst.msk [vmem:[%s263] sm:$0x1] %vm1733, %v1730
        %s1735 = sand.u32 %s162, 1
        %s1736 = scalar_lea.sflag [#allocation3], %s1735
        %s1737 = sand.u32 %s162, 1
        %s1738 = scalar_lea.vmem [#allocation2], %s1737
        // Predicated region
        $region49: #{tpu_custom_call.1} parent=43 // pred_check
          %p1739 = pneg %p172
        $region50: #{tpu_custom_call.1} parent=43 // pred_check_branch
          %1741 = sbr.rel (%p1739) target = $region52
        $region51: #{tpu_custom_call.1} parent=43 // pred_region
          %s1743 = ssub.s32 16, 16
          %1744 = vsyncadd %s1736, %s1743
          %s1745 = smul.addr %s23, 16
          %s1746 = scalar_lea.hbm %s6, %s1745
          %s1748 = sshll.u32 %s1738, 4
          %s1749 = int_to_ptr.vmem [resolvable:$true] %s1748
          %1751 = dma.vmem_to_hbm [thread:$0]  %s1749, 16, %s1746, %s1736
        $region52: #{tpu_custom_call.1} parent=43 // pred_fallthru
          _
        // Predicated region
        $region53: #{tpu_custom_call.1} parent=43 // pred_check
          %p1752 = pneg %p193
        $region54: #{tpu_custom_call.1} parent=43 // pred_check_branch
          %1754 = sbr.rel (%p1752) target = $region56
        $region55: #{tpu_custom_call.1} parent=43 // pred_region
          %s1756 = ssub.s32 128, 128
          %1757 = vsyncadd [#allocation5], %s1756
          %s1759 = sshll.u32 [#allocation4], 4
          %s1760 = int_to_ptr.vmem [resolvable:$true] %s1759
          %1762 = dma.vmem_to_hbm [thread:$0]  %s1760, 128, %s7, [#allocation5]
        $region56: #{tpu_custom_call.1} parent=43 // pred_fallthru
          _
        // Predicated region
        $region57: #{tpu_custom_call.1} parent=43 // pred_check
          %p1763 = pneg %p193
        $region58: #{tpu_custom_call.1} parent=43 // pred_check_branch
          %1765 = sbr.rel (%p1763) target = $region60
        $region59: #{tpu_custom_call.1} parent=43 // pred_region
          %1766 = dma.done [#allocation5], 128
        $region60: #{tpu_custom_call.1} parent=43 // pred_fallthru
          _
      $region44: #{tpu_custom_call.1} parent=5 // pred_fallthru
        _
      %p1767 = scmp.le.s32.totalorder 2, %s18
      // Predicated region
      $region61: #{tpu_custom_call.1} parent=5 // pred_check
        %p1768 = pneg %p1767
      $region62: #{tpu_custom_call.1} parent=5 // pred_check_branch
        %1770 = sbr.rel (%p1768) target = $region64
      $region63: #{tpu_custom_call.1} parent=5 // pred_region
        %s1771 = ssub.s32 %s18, 2
        // Predicated region
        $region65: #{tpu_custom_call.1} parent=63 // pred_check
          %p1772 = pneg %p178
        $region66: #{tpu_custom_call.1} parent=63 // pred_check_branch
          %1774 = sbr.rel (%p1772) target = $region68
        $region67: #{tpu_custom_call.1} parent=63 // pred_region
          %s1775 = sand.u32 %s163, 1
          %s1776 = scalar_lea.sflag [#allocation3], %s1775
          %s1777 = sand.u32 %s163, 1
          %s1778 = scalar_lea.vmem [#allocation2], %s1777
          %1779 = dma.done %s1776, 16
        $region68: #{tpu_custom_call.1} parent=63 // pred_fallthru
          _
      $region64: #{tpu_custom_call.1} parent=5 // pred_fallthru
        _
    $region6: #{tpu_custom_call.1} parent=1 // loop_footer
      %s22 = sadd.s32 1, %s18
    $region7: #{tpu_custom_call.1} parent=1 // loop_footer_branch
      %17 = sbr.rel target = $region3
    $region8: #{tpu_custom_call.1} parent=1 // loop_exit
      _
    %1780 = vsyncpa [#allocation3], 1
    %s1781 = scalar_lea.sflag [#allocation3], 1
    %1782 = vsyncpa %s1781, 1
    %1783 = vsyncpa [#allocation5], 1

</llo_original>
